<compile_context>
chip_gen: v6e
topology: v6e:2x2x1
jax: 0.10.0
libtpu: 0.0.40
codegen_flags: <defaults>
</compile_context>

<pallas_src>
import jax
import jax.numpy as jnp
from jax.experimental import pallas as pl
from jax.experimental.pallas import tpu as pltpu

INPUT_DIM = 16
HIDDEN_DIM = 32
OUTPUT_DIM = 1
NUM_LAYERS = 3
BATCH = 2
SEQ = 8


def _rnn_fc_kernel(x_ref,      # (B, T, D)  batch-first input
                   w0_ref,     # (D, H)     W_ih_l0^T
                   b0_ref,     # (1, H)     b_ih_l0 + b_hh_l0
                   w0c_ref,    # (H, 2H)    [W_hh_l0^T | W_ih_l1^T]
                   w1c_ref,    # (H, 2H)    [W_hh_l1^T | W_ih_l2^T]
                   whh2_ref,   # (H, H)     W_hh_l2^T
                   b1_ref,     # (1, H)     b_ih_l1 + b_hh_l1
                   b2_ref,     # (1, H)     b_ih_l2 + b_hh_l2
                   wfc_ref,    # (1, H)     fc weight as a row
                   bfc_ref,    # (1, 1)     fc bias
                   out_ref):   # (B, O)
    B, T, D = x_ref.shape
    H = whh2_ref.shape[0]

    # --- Hoisted layer-0 input projection (+b0) for all T steps: one MXU push.
    x_flat = x_ref[...].reshape(B * T, D)
    xw0 = (jnp.dot(x_flat, w0_ref[...], preferred_element_type=jnp.float32)
           + b0_ref[...]).reshape(B, T, H)

    w0c = w0c_ref[...]
    w1c = w1c_ref[...]
    whh2 = whh2_ref[...]

    # Hoist bias broadcasts out of the unrolled loop (broadcasts are not CSE'd).
    b1b = jnp.broadcast_to(b1_ref[...], (B, H))
    b2b = jnp.broadcast_to(b2_ref[...], (B, H))

    # g0 = h0[t-1] @ [whh0 | wih1], g1 = h1[t-1] @ [whh1 | wih2],
    # g2 = h2[t-1] @ whh2.  All start at zero (h_{-1} = 0).
    g0 = jnp.zeros((B, 2 * H), jnp.float32)
    g1 = jnp.zeros((B, 2 * H), jnp.float32)
    g2 = jnp.zeros((B, H), jnp.float32)
    h2 = jnp.zeros((B, H), jnp.float32)

    # Static unroll over T (T=8): only static slices, 3 MXU pushes per step
    # (2 on the last step), wavefront-shaped dependency chain.
    for t in range(T):
        h0 = jnp.tanh(xw0[:, t, :] + g0[:, :H])
        g0 = jnp.dot(h0, w0c, preferred_element_type=jnp.float32)
        h1 = jnp.tanh((g1[:, :H] + b1b) + g0[:, H:])
        g1 = jnp.dot(h1, w1c, preferred_element_type=jnp.float32)
        h2 = jnp.tanh((g2 + b2b) + g1[:, H:])
        if t + 1 < T:  # last-step whh2 push feeds nothing -> skip it
            g2 = jnp.dot(h2, whh2, preferred_element_type=jnp.float32)

    # O=1 FC head on VPU + lane reduce (no N=1 MXU push).
    out_ref[...] = (jnp.sum(h2 * wfc_ref[...], axis=-1, keepdims=True)
                    + bfc_ref[...])


def pack_params(params):
    """One-time weight packing for the fused kernel."""
    return {
        "w0": params["wih0"],                                          # (D, H)
        "b0": params["b0"],                                            # (1, H)
        "w0cat": jnp.concatenate([params["whh0"], params["wih1"]], 1),  # (H, 2H)
        "w1cat": jnp.concatenate([params["whh1"], params["wih2"]], 1),  # (H, 2H)
        "whh2": params["whh2"],                                        # (H, H)
        "b1": params["b1"],                                            # (1, H)
        "b2": params["b2"],                                            # (1, H)
        "wfc_row": params["wfc"].T,                                    # (1, H)
        "bfc": params["bfc"],                                          # (1, 1)
    }


def rnn_model_forward(x, packed):
    """x: (B, T, D) float32, batch_first like the PyTorch module."""
    B = x.shape[0]
    O = packed["bfc"].shape[1]

    vmem = pl.BlockSpec(memory_space=pltpu.MemorySpace.VMEM)
    args = (
        x,
        packed["w0"], packed["b0"],
        packed["w0cat"], packed["w1cat"], packed["whh2"],
        packed["b1"], packed["b2"],
        packed["wfc_row"], packed["bfc"],
    )
    # Gridless: total working set is ~25 KB, nothing to pipeline/tile.
    # TODO(synk): for production batch sizes, add a batch grid with
    # dimension_semantics=("parallel",) so v7x's two TensorCores split it.
    return pl.pallas_call(
        _rnn_fc_kernel,
        out_shape=jax.ShapeDtypeStruct((B, O), jnp.float32),
        in_specs=[vmem] * len(args),
        out_specs=vmem,
    )(*args)


def init_params(key, input_dim, hidden_dim, output_dim):
    """Deterministic synthetic init (PyTorch-style uniform(-1/sqrt(H), 1/sqrt(H)))."""
    ks = jax.random.split(key, 16)
    bound = 1.0 / jnp.sqrt(jnp.float32(hidden_dim))

    def u(k, shape):
        return jax.random.uniform(k, shape, jnp.float32, -bound, bound)

    params = {}
    # layer 0: input_dim -> hidden; layers 1,2: hidden -> hidden.
    params["wih0"] = u(ks[0], (input_dim, hidden_dim))    # W_ih_l0^T
    params["whh0"] = u(ks[1], (hidden_dim, hidden_dim))   # W_hh_l0^T
    params["b0"] = u(ks[2], (1, hidden_dim)) + u(ks[3], (1, hidden_dim))
    params["wih1"] = u(ks[4], (hidden_dim, hidden_dim))
    params["whh1"] = u(ks[5], (hidden_dim, hidden_dim))
    params["b1"] = u(ks[6], (1, hidden_dim)) + u(ks[7], (1, hidden_dim))
    params["wih2"] = u(ks[8], (hidden_dim, hidden_dim))
    params["whh2"] = u(ks[9], (hidden_dim, hidden_dim))
    params["b2"] = u(ks[10], (1, hidden_dim)) + u(ks[11], (1, hidden_dim))
    params["wfc"] = u(ks[12], (hidden_dim, output_dim))   # W_fc^T
    params["bfc"] = u(ks[13], (1, output_dim))
    return params


def reference_forward(x, params):
    """Pure-JAX reference of the PyTorch module (unpacked weights)."""
    B, T, D = x.shape
    H = params["whh0"].shape[0]
    h0 = h1 = h2 = jnp.zeros((B, H), jnp.float32)
    for t in range(T):
        xt = x[:, t, :]
        h0 = jnp.tanh(xt @ params["wih0"] + h0 @ params["whh0"] + params["b0"])
        h1 = jnp.tanh(h0 @ params["wih1"] + h1 @ params["whh1"] + params["b1"])
        h2 = jnp.tanh(h1 @ params["wih2"] + h2 @ params["whh2"] + params["b2"])
    return h2 @ params["wfc"] + params["bfc"]


if __name__ == "__main__":
    key = jax.random.PRNGKey(0)
    k_x, k_p = jax.random.split(key)

    x = jax.random.normal(k_x, (BATCH, SEQ, INPUT_DIM), jnp.float32)
    params = init_params(k_p, INPUT_DIM, HIDDEN_DIM, OUTPUT_DIM)
    packed = pack_params(params)

    out = rnn_model_forward(x, packed)
    out = jax.block_until_ready(out)

    ref = reference_forward(x, params)
    assert out.shape == (BATCH, OUTPUT_DIM)
    assert jnp.allclose(out, ref, rtol=1e-3, atol=1e-3)

    print("KERNEL_OK")
</pallas_src>

<mosaic_0001>
module attributes {stable_mosaic.version = 11 : i64} {
  func.func @_rnn_fc_kernel(%arg0: memref<2x8x16xf32, #tpu.memory_space<vmem>>, %arg1: memref<16x32xf32, #tpu.memory_space<vmem>>, %arg2: memref<1x32xf32, #tpu.memory_space<vmem>>, %arg3: memref<32x64xf32, #tpu.memory_space<vmem>>, %arg4: memref<32x64xf32, #tpu.memory_space<vmem>>, %arg5: memref<32x32xf32, #tpu.memory_space<vmem>>, %arg6: memref<1x32xf32, #tpu.memory_space<vmem>>, %arg7: memref<1x32xf32, #tpu.memory_space<vmem>>, %arg8: memref<1x32xf32, #tpu.memory_space<vmem>>, %arg9: memref<1x1xf32, #tpu.memory_space<vmem>>, %arg10: memref<2x1xf32, #tpu.memory_space<vmem>>) attributes {dimension_semantics = [], scalar_prefetch = 0 : i64, scratch_operands = 0 : i64, tpu.core_type = #tpu.core_type<tc>} {
    %c0 = arith.constant 0 : index
    %c0_0 = arith.constant 0 : index
    %c0_1 = arith.constant 0 : index
    %0 = vector.load %arg0[%c0, %c0_0, %c0_1] : memref<2x8x16xf32, #tpu.memory_space<vmem>>, vector<2x8x16xf32>
    %1 = vector.shape_cast %0 : vector<2x8x16xf32> to vector<16x16xf32>
    %c0_2 = arith.constant 0 : index
    %c0_3 = arith.constant 0 : index
    %2 = vector.load %arg1[%c0_2, %c0_3] : memref<16x32xf32, #tpu.memory_space<vmem>>, vector<16x32xf32>
    %cst = arith.constant dense<0.000000e+00> : vector<16x32xf32>
    %3 = tpu.matmul %1, %2, %cst {dimension_numbers = #tpu.dot_dimension_numbers<[1], [0], [0], [1], [0, 0, 1, 1], [], []>} : vector<16x16xf32>, vector<16x32xf32>, vector<16x32xf32> -> vector<16x32xf32>
    %c0_4 = arith.constant 0 : index
    %c0_5 = arith.constant 0 : index
    %4 = vector.load %arg2[%c0_4, %c0_5] : memref<1x32xf32, #tpu.memory_space<vmem>>, vector<1x32xf32>
    %5 = vector.broadcast %4 : vector<1x32xf32> to vector<16x32xf32>
    %6 = arith.addf %3, %5 : vector<16x32xf32>
    %7 = vector.shape_cast %6 : vector<16x32xf32> to vector<2x8x32xf32>
    %c0_6 = arith.constant 0 : index
    %c0_7 = arith.constant 0 : index
    %8 = vector.load %arg3[%c0_6, %c0_7] : memref<32x64xf32, #tpu.memory_space<vmem>>, vector<32x64xf32>
    %c0_8 = arith.constant 0 : index
    %c0_9 = arith.constant 0 : index
    %9 = vector.load %arg4[%c0_8, %c0_9] : memref<32x64xf32, #tpu.memory_space<vmem>>, vector<32x64xf32>
    %c0_10 = arith.constant 0 : index
    %c0_11 = arith.constant 0 : index
    %10 = vector.load %arg5[%c0_10, %c0_11] : memref<32x32xf32, #tpu.memory_space<vmem>>, vector<32x32xf32>
    %c0_12 = arith.constant 0 : index
    %c0_13 = arith.constant 0 : index
    %11 = vector.load %arg6[%c0_12, %c0_13] : memref<1x32xf32, #tpu.memory_space<vmem>>, vector<1x32xf32>
    %12 = vector.shape_cast %11 : vector<1x32xf32> to vector<1x32xf32>
    %13 = vector.broadcast %12 : vector<1x32xf32> to vector<2x32xf32>
    %c0_14 = arith.constant 0 : index
    %c0_15 = arith.constant 0 : index
    %14 = vector.load %arg7[%c0_14, %c0_15] : memref<1x32xf32, #tpu.memory_space<vmem>>, vector<1x32xf32>
    %15 = vector.shape_cast %14 : vector<1x32xf32> to vector<1x32xf32>
    %16 = vector.broadcast %15 : vector<1x32xf32> to vector<2x32xf32>
    %cst_16 = arith.constant 0.000000e+00 : f32
    %17 = vector.broadcast %cst_16 : f32 to vector<2x64xf32>
    %cst_17 = arith.constant 0.000000e+00 : f32
    %18 = vector.broadcast %cst_17 : f32 to vector<2x64xf32>
    %cst_18 = arith.constant 0.000000e+00 : f32
    %19 = vector.broadcast %cst_18 : f32 to vector<2x32xf32>
    %20 = vector.extract_strided_slice %7 {offsets = [0, 0, 0], sizes = [2, 1, 32], strides = [1, 1, 1]} : vector<2x8x32xf32> to vector<2x1x32xf32>
    %21 = vector.shape_cast %20 : vector<2x1x32xf32> to vector<2x32xf32>
    %22 = vector.extract_strided_slice %17 {offsets = [0, 0], sizes = [2, 32], strides = [1, 1]} : vector<2x64xf32> to vector<2x32xf32>
    %23 = arith.addf %21, %22 : vector<2x32xf32>
    %24 = math.tanh %23 : vector<2x32xf32>
    %cst_19 = arith.constant dense<0.000000e+00> : vector<2x64xf32>
    %25 = tpu.matmul %24, %8, %cst_19 {dimension_numbers = #tpu.dot_dimension_numbers<[1], [0], [0], [1], [0, 0, 1, 1], [], []>} : vector<2x32xf32>, vector<32x64xf32>, vector<2x64xf32> -> vector<2x64xf32>
    %26 = vector.extract_strided_slice %18 {offsets = [0, 0], sizes = [2, 32], strides = [1, 1]} : vector<2x64xf32> to vector<2x32xf32>
    %27 = arith.addf %26, %13 : vector<2x32xf32>
    %28 = vector.extract_strided_slice %25 {offsets = [0, 32], sizes = [2, 32], strides = [1, 1]} : vector<2x64xf32> to vector<2x32xf32>
    %29 = arith.addf %27, %28 : vector<2x32xf32>
    %30 = math.tanh %29 : vector<2x32xf32>
    %cst_20 = arith.constant dense<0.000000e+00> : vector<2x64xf32>
    %31 = tpu.matmul %30, %9, %cst_20 {dimension_numbers = #tpu.dot_dimension_numbers<[1], [0], [0], [1], [0, 0, 1, 1], [], []>} : vector<2x32xf32>, vector<32x64xf32>, vector<2x64xf32> -> vector<2x64xf32>
    %32 = arith.addf %19, %16 : vector<2x32xf32>
    %33 = vector.extract_strided_slice %31 {offsets = [0, 32], sizes = [2, 32], strides = [1, 1]} : vector<2x64xf32> to vector<2x32xf32>
    %34 = arith.addf %32, %33 : vector<2x32xf32>
    %35 = math.tanh %34 : vector<2x32xf32>
    %cst_21 = arith.constant dense<0.000000e+00> : vector<2x32xf32>
    %36 = tpu.matmul %35, %10, %cst_21 {dimension_numbers = #tpu.dot_dimension_numbers<[1], [0], [0], [1], [0, 0, 1, 1], [], []>} : vector<2x32xf32>, vector<32x32xf32>, vector<2x32xf32> -> vector<2x32xf32>
    %37 = vector.extract_strided_slice %7 {offsets = [0, 1, 0], sizes = [2, 1, 32], strides = [1, 1, 1]} : vector<2x8x32xf32> to vector<2x1x32xf32>
    %38 = vector.shape_cast %37 : vector<2x1x32xf32> to vector<2x32xf32>
    %39 = vector.extract_strided_slice %25 {offsets = [0, 0], sizes = [2, 32], strides = [1, 1]} : vector<2x64xf32> to vector<2x32xf32>
    %40 = arith.addf %38, %39 : vector<2x32xf32>
    %41 = math.tanh %40 : vector<2x32xf32>
    %cst_22 = arith.constant dense<0.000000e+00> : vector<2x64xf32>
    %42 = tpu.matmul %41, %8, %cst_22 {dimension_numbers = #tpu.dot_dimension_numbers<[1], [0], [0], [1], [0, 0, 1, 1], [], []>} : vector<2x32xf32>, vector<32x64xf32>, vector<2x64xf32> -> vector<2x64xf32>
    %43 = vector.extract_strided_slice %31 {offsets = [0, 0], sizes = [2, 32], strides = [1, 1]} : vector<2x64xf32> to vector<2x32xf32>
    %44 = arith.addf %43, %13 : vector<2x32xf32>
    %45 = vector.extract_strided_slice %42 {offsets = [0, 32], sizes = [2, 32], strides = [1, 1]} : vector<2x64xf32> to vector<2x32xf32>
    %46 = arith.addf %44, %45 : vector<2x32xf32>
    %47 = math.tanh %46 : vector<2x32xf32>
    %cst_23 = arith.constant dense<0.000000e+00> : vector<2x64xf32>
    %48 = tpu.matmul %47, %9, %cst_23 {dimension_numbers = #tpu.dot_dimension_numbers<[1], [0], [0], [1], [0, 0, 1, 1], [], []>} : vector<2x32xf32>, vector<32x64xf32>, vector<2x64xf32> -> vector<2x64xf32>
    %49 = arith.addf %36, %16 : vector<2x32xf32>
    %50 = vector.extract_strided_slice %48 {offsets = [0, 32], sizes = [2, 32], strides = [1, 1]} : vector<2x64xf32> to vector<2x32xf32>
    %51 = arith.addf %49, %50 : vector<2x32xf32>
    %52 = math.tanh %51 : vector<2x32xf32>
    %cst_24 = arith.constant dense<0.000000e+00> : vector<2x32xf32>
    %53 = tpu.matmul %52, %10, %cst_24 {dimension_numbers = #tpu.dot_dimension_numbers<[1], [0], [0], [1], [0, 0, 1, 1], [], []>} : vector<2x32xf32>, vector<32x32xf32>, vector<2x32xf32> -> vector<2x32xf32>
    %54 = vector.extract_strided_slice %7 {offsets = [0, 2, 0], sizes = [2, 1, 32], strides = [1, 1, 1]} : vector<2x8x32xf32> to vector<2x1x32xf32>
    %55 = vector.shape_cast %54 : vector<2x1x32xf32> to vector<2x32xf32>
    %56 = vector.extract_strided_slice %42 {offsets = [0, 0], sizes = [2, 32], strides = [1, 1]} : vector<2x64xf32> to vector<2x32xf32>
    %57 = arith.addf %55, %56 : vector<2x32xf32>
    %58 = math.tanh %57 : vector<2x32xf32>
    %cst_25 = arith.constant dense<0.000000e+00> : vector<2x64xf32>
    %59 = tpu.matmul %58, %8, %cst_25 {dimension_numbers = #tpu.dot_dimension_numbers<[1], [0], [0], [1], [0, 0, 1, 1], [], []>} : vector<2x32xf32>, vector<32x64xf32>, vector<2x64xf32> -> vector<2x64xf32>
    %60 = vector.extract_strided_slice %48 {offsets = [0, 0], sizes = [2, 32], strides = [1, 1]} : vector<2x64xf32> to vector<2x32xf32>
    %61 = arith.addf %60, %13 : vector<2x32xf32>
    %62 = vector.extract_strided_slice %59 {offsets = [0, 32], sizes = [2, 32], strides = [1, 1]} : vector<2x64xf32> to vector<2x32xf32>
    %63 = arith.addf %61, %62 : vector<2x32xf32>
    %64 = math.tanh %63 : vector<2x32xf32>
    %cst_26 = arith.constant dense<0.000000e+00> : vector<2x64xf32>
    %65 = tpu.matmul %64, %9, %cst_26 {dimension_numbers = #tpu.dot_dimension_numbers<[1], [0], [0], [1], [0, 0, 1, 1], [], []>} : vector<2x32xf32>, vector<32x64xf32>, vector<2x64xf32> -> vector<2x64xf32>
    %66 = arith.addf %53, %16 : vector<2x32xf32>
    %67 = vector.extract_strided_slice %65 {offsets = [0, 32], sizes = [2, 32], strides = [1, 1]} : vector<2x64xf32> to vector<2x32xf32>
    %68 = arith.addf %66, %67 : vector<2x32xf32>
    %69 = math.tanh %68 : vector<2x32xf32>
    %cst_27 = arith.constant dense<0.000000e+00> : vector<2x32xf32>
    %70 = tpu.matmul %69, %10, %cst_27 {dimension_numbers = #tpu.dot_dimension_numbers<[1], [0], [0], [1], [0, 0, 1, 1], [], []>} : vector<2x32xf32>, vector<32x32xf32>, vector<2x32xf32> -> vector<2x32xf32>
    %71 = vector.extract_strided_slice %7 {offsets = [0, 3, 0], sizes = [2, 1, 32], strides = [1, 1, 1]} : vector<2x8x32xf32> to vector<2x1x32xf32>
    %72 = vector.shape_cast %71 : vector<2x1x32xf32> to vector<2x32xf32>
    %73 = vector.extract_strided_slice %59 {offsets = [0, 0], sizes = [2, 32], strides = [1, 1]} : vector<2x64xf32> to vector<2x32xf32>
    %74 = arith.addf %72, %73 : vector<2x32xf32>
    %75 = math.tanh %74 : vector<2x32xf32>
    %cst_28 = arith.constant dense<0.000000e+00> : vector<2x64xf32>
    %76 = tpu.matmul %75, %8, %cst_28 {dimension_numbers = #tpu.dot_dimension_numbers<[1], [0], [0], [1], [0, 0, 1, 1], [], []>} : vector<2x32xf32>, vector<32x64xf32>, vector<2x64xf32> -> vector<2x64xf32>
    %77 = vector.extract_strided_slice %65 {offsets = [0, 0], sizes = [2, 32], strides = [1, 1]} : vector<2x64xf32> to vector<2x32xf32>
    %78 = arith.addf %77, %13 : vector<2x32xf32>
    %79 = vector.extract_strided_slice %76 {offsets = [0, 32], sizes = [2, 32], strides = [1, 1]} : vector<2x64xf32> to vector<2x32xf32>
    %80 = arith.addf %78, %79 : vector<2x32xf32>
    %81 = math.tanh %80 : vector<2x32xf32>
    %cst_29 = arith.constant dense<0.000000e+00> : vector<2x64xf32>
    %82 = tpu.matmul %81, %9, %cst_29 {dimension_numbers = #tpu.dot_dimension_numbers<[1], [0], [0], [1], [0, 0, 1, 1], [], []>} : vector<2x32xf32>, vector<32x64xf32>, vector<2x64xf32> -> vector<2x64xf32>
    %83 = arith.addf %70, %16 : vector<2x32xf32>
    %84 = vector.extract_strided_slice %82 {offsets = [0, 32], sizes = [2, 32], strides = [1, 1]} : vector<2x64xf32> to vector<2x32xf32>
    %85 = arith.addf %83, %84 : vector<2x32xf32>
    %86 = math.tanh %85 : vector<2x32xf32>
    %cst_30 = arith.constant dense<0.000000e+00> : vector<2x32xf32>
    %87 = tpu.matmul %86, %10, %cst_30 {dimension_numbers = #tpu.dot_dimension_numbers<[1], [0], [0], [1], [0, 0, 1, 1], [], []>} : vector<2x32xf32>, vector<32x32xf32>, vector<2x32xf32> -> vector<2x32xf32>
    %88 = vector.extract_strided_slice %7 {offsets = [0, 4, 0], sizes = [2, 1, 32], strides = [1, 1, 1]} : vector<2x8x32xf32> to vector<2x1x32xf32>
    %89 = vector.shape_cast %88 : vector<2x1x32xf32> to vector<2x32xf32>
    %90 = vector.extract_strided_slice %76 {offsets = [0, 0], sizes = [2, 32], strides = [1, 1]} : vector<2x64xf32> to vector<2x32xf32>
    %91 = arith.addf %89, %90 : vector<2x32xf32>
    %92 = math.tanh %91 : vector<2x32xf32>
    %cst_31 = arith.constant dense<0.000000e+00> : vector<2x64xf32>
    %93 = tpu.matmul %92, %8, %cst_31 {dimension_numbers = #tpu.dot_dimension_numbers<[1], [0], [0], [1], [0, 0, 1, 1], [], []>} : vector<2x32xf32>, vector<32x64xf32>, vector<2x64xf32> -> vector<2x64xf32>
    %94 = vector.extract_strided_slice %82 {offsets = [0, 0], sizes = [2, 32], strides = [1, 1]} : vector<2x64xf32> to vector<2x32xf32>
    %95 = arith.addf %94, %13 : vector<2x32xf32>
    %96 = vector.extract_strided_slice %93 {offsets = [0, 32], sizes = [2, 32], strides = [1, 1]} : vector<2x64xf32> to vector<2x32xf32>
    %97 = arith.addf %95, %96 : vector<2x32xf32>
    %98 = math.tanh %97 : vector<2x32xf32>
    %cst_32 = arith.constant dense<0.000000e+00> : vector<2x64xf32>
    %99 = tpu.matmul %98, %9, %cst_32 {dimension_numbers = #tpu.dot_dimension_numbers<[1], [0], [0], [1], [0, 0, 1, 1], [], []>} : vector<2x32xf32>, vector<32x64xf32>, vector<2x64xf32> -> vector<2x64xf32>
    %100 = arith.addf %87, %16 : vector<2x32xf32>
    %101 = vector.extract_strided_slice %99 {offsets = [0, 32], sizes = [2, 32], strides = [1, 1]} : vector<2x64xf32> to vector<2x32xf32>
    %102 = arith.addf %100, %101 : vector<2x32xf32>
    %103 = math.tanh %102 : vector<2x32xf32>
    %cst_33 = arith.constant dense<0.000000e+00> : vector<2x32xf32>
    %104 = tpu.matmul %103, %10, %cst_33 {dimension_numbers = #tpu.dot_dimension_numbers<[1], [0], [0], [1], [0, 0, 1, 1], [], []>} : vector<2x32xf32>, vector<32x32xf32>, vector<2x32xf32> -> vector<2x32xf32>
    %105 = vector.extract_strided_slice %7 {offsets = [0, 5, 0], sizes = [2, 1, 32], strides = [1, 1, 1]} : vector<2x8x32xf32> to vector<2x1x32xf32>
    %106 = vector.shape_cast %105 : vector<2x1x32xf32> to vector<2x32xf32>
    %107 = vector.extract_strided_slice %93 {offsets = [0, 0], sizes = [2, 32], strides = [1, 1]} : vector<2x64xf32> to vector<2x32xf32>
    %108 = arith.addf %106, %107 : vector<2x32xf32>
    %109 = math.tanh %108 : vector<2x32xf32>
    %cst_34 = arith.constant dense<0.000000e+00> : vector<2x64xf32>
    %110 = tpu.matmul %109, %8, %cst_34 {dimension_numbers = #tpu.dot_dimension_numbers<[1], [0], [0], [1], [0, 0, 1, 1], [], []>} : vector<2x32xf32>, vector<32x64xf32>, vector<2x64xf32> -> vector<2x64xf32>
    %111 = vector.extract_strided_slice %99 {offsets = [0, 0], sizes = [2, 32], strides = [1, 1]} : vector<2x64xf32> to vector<2x32xf32>
    %112 = arith.addf %111, %13 : vector<2x32xf32>
    %113 = vector.extract_strided_slice %110 {offsets = [0, 32], sizes = [2, 32], strides = [1, 1]} : vector<2x64xf32> to vector<2x32xf32>
    %114 = arith.addf %112, %113 : vector<2x32xf32>
    %115 = math.tanh %114 : vector<2x32xf32>
    %cst_35 = arith.constant dense<0.000000e+00> : vector<2x64xf32>
    %116 = tpu.matmul %115, %9, %cst_35 {dimension_numbers = #tpu.dot_dimension_numbers<[1], [0], [0], [1], [0, 0, 1, 1], [], []>} : vector<2x32xf32>, vector<32x64xf32>, vector<2x64xf32> -> vector<2x64xf32>
    %117 = arith.addf %104, %16 : vector<2x32xf32>
    %118 = vector.extract_strided_slice %116 {offsets = [0, 32], sizes = [2, 32], strides = [1, 1]} : vector<2x64xf32> to vector<2x32xf32>
    %119 = arith.addf %117, %118 : vector<2x32xf32>
    %120 = math.tanh %119 : vector<2x32xf32>
    %cst_36 = arith.constant dense<0.000000e+00> : vector<2x32xf32>
    %121 = tpu.matmul %120, %10, %cst_36 {dimension_numbers = #tpu.dot_dimension_numbers<[1], [0], [0], [1], [0, 0, 1, 1], [], []>} : vector<2x32xf32>, vector<32x32xf32>, vector<2x32xf32> -> vector<2x32xf32>
    %122 = vector.extract_strided_slice %7 {offsets = [0, 6, 0], sizes = [2, 1, 32], strides = [1, 1, 1]} : vector<2x8x32xf32> to vector<2x1x32xf32>
    %123 = vector.shape_cast %122 : vector<2x1x32xf32> to vector<2x32xf32>
    %124 = vector.extract_strided_slice %110 {offsets = [0, 0], sizes = [2, 32], strides = [1, 1]} : vector<2x64xf32> to vector<2x32xf32>
    %125 = arith.addf %123, %124 : vector<2x32xf32>
    %126 = math.tanh %125 : vector<2x32xf32>
    %cst_37 = arith.constant dense<0.000000e+00> : vector<2x64xf32>
    %127 = tpu.matmul %126, %8, %cst_37 {dimension_numbers = #tpu.dot_dimension_numbers<[1], [0], [0], [1], [0, 0, 1, 1], [], []>} : vector<2x32xf32>, vector<32x64xf32>, vector<2x64xf32> -> vector<2x64xf32>
    %128 = vector.extract_strided_slice %116 {offsets = [0, 0], sizes = [2, 32], strides = [1, 1]} : vector<2x64xf32> to vector<2x32xf32>
    %129 = arith.addf %128, %13 : vector<2x32xf32>
    %130 = vector.extract_strided_slice %127 {offsets = [0, 32], sizes = [2, 32], strides = [1, 1]} : vector<2x64xf32> to vector<2x32xf32>
    %131 = arith.addf %129, %130 : vector<2x32xf32>
    %132 = math.tanh %131 : vector<2x32xf32>
    %cst_38 = arith.constant dense<0.000000e+00> : vector<2x64xf32>
    %133 = tpu.matmul %132, %9, %cst_38 {dimension_numbers = #tpu.dot_dimension_numbers<[1], [0], [0], [1], [0, 0, 1, 1], [], []>} : vector<2x32xf32>, vector<32x64xf32>, vector<2x64xf32> -> vector<2x64xf32>
    %134 = arith.addf %121, %16 : vector<2x32xf32>
    %135 = vector.extract_strided_slice %133 {offsets = [0, 32], sizes = [2, 32], strides = [1, 1]} : vector<2x64xf32> to vector<2x32xf32>
    %136 = arith.addf %134, %135 : vector<2x32xf32>
    %137 = math.tanh %136 : vector<2x32xf32>
    %cst_39 = arith.constant dense<0.000000e+00> : vector<2x32xf32>
    %138 = tpu.matmul %137, %10, %cst_39 {dimension_numbers = #tpu.dot_dimension_numbers<[1], [0], [0], [1], [0, 0, 1, 1], [], []>} : vector<2x32xf32>, vector<32x32xf32>, vector<2x32xf32> -> vector<2x32xf32>
    %139 = vector.extract_strided_slice %7 {offsets = [0, 7, 0], sizes = [2, 1, 32], strides = [1, 1, 1]} : vector<2x8x32xf32> to vector<2x1x32xf32>
    %140 = vector.shape_cast %139 : vector<2x1x32xf32> to vector<2x32xf32>
    %141 = vector.extract_strided_slice %127 {offsets = [0, 0], sizes = [2, 32], strides = [1, 1]} : vector<2x64xf32> to vector<2x32xf32>
    %142 = arith.addf %140, %141 : vector<2x32xf32>
    %143 = math.tanh %142 : vector<2x32xf32>
    %cst_40 = arith.constant dense<0.000000e+00> : vector<2x64xf32>
    %144 = tpu.matmul %143, %8, %cst_40 {dimension_numbers = #tpu.dot_dimension_numbers<[1], [0], [0], [1], [0, 0, 1, 1], [], []>} : vector<2x32xf32>, vector<32x64xf32>, vector<2x64xf32> -> vector<2x64xf32>
    %145 = vector.extract_strided_slice %133 {offsets = [0, 0], sizes = [2, 32], strides = [1, 1]} : vector<2x64xf32> to vector<2x32xf32>
    %146 = arith.addf %145, %13 : vector<2x32xf32>
    %147 = vector.extract_strided_slice %144 {offsets = [0, 32], sizes = [2, 32], strides = [1, 1]} : vector<2x64xf32> to vector<2x32xf32>
    %148 = arith.addf %146, %147 : vector<2x32xf32>
    %149 = math.tanh %148 : vector<2x32xf32>
    %cst_41 = arith.constant dense<0.000000e+00> : vector<2x64xf32>
    %150 = tpu.matmul %149, %9, %cst_41 {dimension_numbers = #tpu.dot_dimension_numbers<[1], [0], [0], [1], [0, 0, 1, 1], [], []>} : vector<2x32xf32>, vector<32x64xf32>, vector<2x64xf32> -> vector<2x64xf32>
    %151 = arith.addf %138, %16 : vector<2x32xf32>
    %152 = vector.extract_strided_slice %150 {offsets = [0, 32], sizes = [2, 32], strides = [1, 1]} : vector<2x64xf32> to vector<2x32xf32>
    %153 = arith.addf %151, %152 : vector<2x32xf32>
    %154 = math.tanh %153 : vector<2x32xf32>
    %c0_42 = arith.constant 0 : index
    %c0_43 = arith.constant 0 : index
    %155 = vector.load %arg8[%c0_42, %c0_43] : memref<1x32xf32, #tpu.memory_space<vmem>>, vector<1x32xf32>
    %156 = vector.broadcast %155 : vector<1x32xf32> to vector<2x32xf32>
    %157 = arith.mulf %154, %156 : vector<2x32xf32>
    %cst_44 = arith.constant dense<0.000000e+00> : vector<2xf32>
    %158 = vector.multi_reduction <add>, %157, %cst_44 [1] : vector<2x32xf32> to vector<2xf32>
    %159 = vector.shape_cast %158 : vector<2xf32> to vector<2x1xf32>
    %c0_45 = arith.constant 0 : index
    %c0_46 = arith.constant 0 : index
    %160 = vector.load %arg9[%c0_45, %c0_46] : memref<1x1xf32, #tpu.memory_space<vmem>>, vector<1x1xf32>
    %161 = vector.broadcast %160 : vector<1x1xf32> to vector<2x1xf32>
    %162 = arith.addf %159, %161 : vector<2x1xf32>
    %c0_47 = arith.constant 0 : index
    %c0_48 = arith.constant 0 : index
    %163 = vector.load %arg10[%c0_47, %c0_48] : memref<2x1xf32, #tpu.memory_space<vmem>>, vector<2x1xf32>
    tpu.vector_store %arg10[%c0_47, %c0_48], %162 {strides = array<i32>} : memref<2x1xf32, #tpu.memory_space<vmem>>, vector<2x1xf32>,
    return
  }
}

</mosaic_0001>

<llo_original>
// kernel: tpu_custom_call.1
$region0: #{tpu_custom_call.1}
  #allocation0 [shape = 'u32[]', space=smem, size = 0x4, offset = 0x4, fixed_abs, tag = 'smem constant byte address 0x4 - core index']
  #allocation1 [shape = 'u32[144,128]{1,0:T(1,128)}', space=vmem, size = 0x12000, scoped, tag = 'internal scratch']
  #allocation2 [shape = 'f32[1,1]{1,0:T(1,128)S(1)}', space=vmem, size = 0x200, scoped, tag = 'scoped memory for tpu_custom_call.1']
  %s0 = inlined_call_operand.hbm [shape: f32[2,8,16], index: 0, kind: input, shape index: {}]
  %s1 = inlined_call_operand.hbm [shape: f32[16,32], index: 1, kind: input, shape index: {}]
  %s2 = inlined_call_operand.vmem [shape: f32[1,32], index: 2, kind: input, shape index: {}]
  %s3 = inlined_call_operand.hbm [shape: f32[32,64], index: 3, kind: input, shape index: {}]
  %s4 = inlined_call_operand.hbm [shape: f32[32,64], index: 4, kind: input, shape index: {}]
  %s5 = inlined_call_operand.hbm [shape: f32[32,32], index: 5, kind: input, shape index: {}]
  %s6 = inlined_call_operand.vmem [shape: f32[1,32], index: 6, kind: input, shape index: {}]
  %s7 = inlined_call_operand.vmem [shape: f32[1,32], index: 7, kind: input, shape index: {}]
  %s8 = inlined_call_operand.vmem [shape: f32[1,32], index: 8, kind: input, shape index: {}]
  %s9 = inlined_call_operand.<no memory space> [shape: f32[1,1], index: 9, kind: input, shape index: {}]
  %s10 = inlined_call_operand.vmem [shape: f32[2,1], index: 10, kind: output, shape index: {}]
  %s11 = sld [smem:[#allocation0]]
  $region70: #{tpu_custom_call.1} parent=0
    _
  %s13 = ssub.s32 1, %s11
  %s14 = scalar_select 0, %s13, %s11
  %v15 = vstv %s9
  %16 = vst [vmem:[#allocation2] sm:$0x1] %v15
  $region1: #{tpu_custom_call.1} parent=0
    #allocation3 [shape = 'u8[8192]{0}', space=vmem, size = 0x2000, scoped, tag = 'input window, operand 0, single buffered']
    #allocation4 [shape = 's32[1]{0}', space=sflag, size = 0x4, scoped, tag = 'scoped memory for tpu_custom_call.1']
    #allocation5 [shape = 'u8[8192]{0}', space=vmem, size = 0x2000, scoped, tag = 'input window, operand 1, single buffered']
    #allocation6 [shape = 's32[1]{0}', space=sflag, size = 0x4, scoped, tag = 'scoped memory for tpu_custom_call.1']
    #allocation7 [shape = 'u8[16384]{0}', space=vmem, size = 0x4000, scoped, tag = 'input window, operand 3, single buffered']
    #allocation8 [shape = 'u8[16384]{0}', space=vmem, size = 0x4000, scoped, tag = 'input window, operand 4, single buffered']
    #allocation9 [shape = 's32[1]{0}', space=sflag, size = 0x4, scoped, tag = 'scoped memory for tpu_custom_call.1']
    #allocation10 [shape = 'u8[16384]{0}', space=vmem, size = 0x4000, scoped, tag = 'input window, operand 5, single buffered']
    %17 = vsyncpa [#allocation4], 0
    %18 = vsyncpa [#allocation6], 0
    %19 = vsyncpa [#allocation9], 0
    // Predicated region
    $region2: #{tpu_custom_call.1} parent=1 // pred_check
      _
    $region3: #{tpu_custom_call.1} parent=1 // pred_check_branch
      %21 = sbr.rel (0) target = $region5
    $region4: #{tpu_custom_call.1} parent=1 // pred_region
      %s23 = ssub.s32 256, 256
      %24 = vsyncadd [#allocation4], %s23
      %s25 = sshll.u32 [#allocation3], 4
      %s26 = int_to_ptr.vmem [resolvable:$true] %s25
      %31 = dma.hbm_to_vmem [thread:$0]  %s0, 256, %s26, [#allocation4], 128, 128, 8
    $region5: #{tpu_custom_call.1} parent=1 // pred_fallthru
      _
    // Predicated region
    $region6: #{tpu_custom_call.1} parent=1 // pred_check
      _
    $region7: #{tpu_custom_call.1} parent=1 // pred_check_branch
      %33 = sbr.rel (0) target = $region9
    $region8: #{tpu_custom_call.1} parent=1 // pred_region
      %s35 = ssub.s32 256, 256
      %36 = vsyncadd [#allocation6], %s35
      %s37 = sshll.u32 [#allocation5], 4
      %s38 = int_to_ptr.vmem [resolvable:$true] %s37
      %43 = dma.hbm_to_vmem [thread:$0]  %s1, 256, %s38, [#allocation6], 128, 128, 8
    $region9: #{tpu_custom_call.1} parent=1 // pred_fallthru
      _
    // Predicated region
    $region10: #{tpu_custom_call.1} parent=1 // pred_check
      _
    $region11: #{tpu_custom_call.1} parent=1 // pred_check_branch
      %45 = sbr.rel (0) target = $region13
    $region12: #{tpu_custom_call.1} parent=1 // pred_region
      _
    $region13: #{tpu_custom_call.1} parent=1 // pred_fallthru
      _
    // Predicated region
    $region14: #{tpu_custom_call.1} parent=1 // pred_check
      _
    $region15: #{tpu_custom_call.1} parent=1 // pred_check_branch
      %47 = sbr.rel (0) target = $region17
    $region16: #{tpu_custom_call.1} parent=1 // pred_region
      %s49 = ssub.s32 512, 512
      %50 = vsyncadd [#allocation6], %s49
      %s51 = sshll.u32 [#allocation7], 4
      %s52 = int_to_ptr.vmem [resolvable:$true] %s51
      %57 = dma.hbm_to_vmem [thread:$0]  %s3, 512, %s52, [#allocation6], 128, 128, 8
    $region17: #{tpu_custom_call.1} parent=1 // pred_fallthru
      _
    // Predicated region
    $region18: #{tpu_custom_call.1} parent=1 // pred_check
      _
    $region19: #{tpu_custom_call.1} parent=1 // pred_check_branch
      %59 = sbr.rel (0) target = $region21
    $region20: #{tpu_custom_call.1} parent=1 // pred_region
      %s61 = ssub.s32 512, 512
      %62 = vsyncadd [#allocation9], %s61
      %s63 = sshll.u32 [#allocation8], 4
      %s64 = int_to_ptr.vmem [resolvable:$true] %s63
      %69 = dma.hbm_to_vmem [thread:$0]  %s4, 512, %s64, [#allocation9], 128, 128, 8
    $region21: #{tpu_custom_call.1} parent=1 // pred_fallthru
      _
    // Predicated region
    $region22: #{tpu_custom_call.1} parent=1 // pred_check
      _
    $region23: #{tpu_custom_call.1} parent=1 // pred_check_branch
      %71 = sbr.rel (0) target = $region25
    $region24: #{tpu_custom_call.1} parent=1 // pred_region
      %s73 = ssub.s32 512, 512
      %74 = vsyncadd [#allocation9], %s73
      %s75 = sshll.u32 [#allocation10], 4
      %s76 = int_to_ptr.vmem [resolvable:$true] %s75
      %81 = dma.hbm_to_vmem [thread:$0]  %s5, 512, %s76, [#allocation9], 128, 128, 8
    $region25: #{tpu_custom_call.1} parent=1 // pred_fallthru
      _
    // Predicated region
    $region26: #{tpu_custom_call.1} parent=1 // pred_check
      _
    $region27: #{tpu_custom_call.1} parent=1 // pred_check_branch
      %83 = sbr.rel (0) target = $region29
    $region28: #{tpu_custom_call.1} parent=1 // pred_region
      _
    $region29: #{tpu_custom_call.1} parent=1 // pred_fallthru
      _
    // Predicated region
    $region30: #{tpu_custom_call.1} parent=1 // pred_check
      _
    $region31: #{tpu_custom_call.1} parent=1 // pred_check_branch
      %85 = sbr.rel (0) target = $region33
    $region32: #{tpu_custom_call.1} parent=1 // pred_region
      _
    $region33: #{tpu_custom_call.1} parent=1 // pred_fallthru
      _
    // Predicated region
    $region34: #{tpu_custom_call.1} parent=1 // pred_check
      _
    $region35: #{tpu_custom_call.1} parent=1 // pred_check_branch
      %87 = sbr.rel (0) target = $region37
    $region36: #{tpu_custom_call.1} parent=1 // pred_region
      _
    $region37: #{tpu_custom_call.1} parent=1 // pred_fallthru
      _
    // Predicated region
    $region38: #{tpu_custom_call.1} parent=1 // pred_check
      _
    $region39: #{tpu_custom_call.1} parent=1 // pred_check_branch
      %89 = sbr.rel (0) target = $region41
    $region40: #{tpu_custom_call.1} parent=1 // pred_region
      _
    $region41: #{tpu_custom_call.1} parent=1 // pred_fallthru
      _
    // Predicated region
    $region42: #{tpu_custom_call.1} parent=1 // pred_check
      _
    $region43: #{tpu_custom_call.1} parent=1 // pred_check_branch
      %91 = sbr.rel (0) target = $region45
    $region44: #{tpu_custom_call.1} parent=1 // pred_region
      %92 = dma.done [#allocation4], 256
    $region45: #{tpu_custom_call.1} parent=1 // pred_fallthru
      _
    // Predicated region
    $region46: #{tpu_custom_call.1} parent=1 // pred_check
      _
    $region47: #{tpu_custom_call.1} parent=1 // pred_check_branch
      %94 = sbr.rel (0) target = $region49
    $region48: #{tpu_custom_call.1} parent=1 // pred_region
      %95 = dma.done [#allocation6], 256
    $region49: #{tpu_custom_call.1} parent=1 // pred_fallthru
      _
    // Predicated region
    $region50: #{tpu_custom_call.1} parent=1 // pred_check
      _
    $region51: #{tpu_custom_call.1} parent=1 // pred_check_branch
      %97 = sbr.rel (0) target = $region53
    $region52: #{tpu_custom_call.1} parent=1 // pred_region
      %98 = dma.done [#allocation6], 512
    $region53: #{tpu_custom_call.1} parent=1 // pred_fallthru
      _
    // Predicated region
    $region54: #{tpu_custom_call.1} parent=1 // pred_check
      _
    $region55: #{tpu_custom_call.1} parent=1 // pred_check_branch
      %100 = sbr.rel (0) target = $region57
    $region56: #{tpu_custom_call.1} parent=1 // pred_region
      %101 = dma.done [#allocation9], 512
    $region57: #{tpu_custom_call.1} parent=1 // pred_fallthru
      _
    // Predicated region
    $region58: #{tpu_custom_call.1} parent=1 // pred_check
      _
    $region59: #{tpu_custom_call.1} parent=1 // pred_check_branch
      %103 = sbr.rel (0) target = $region61
    $region60: #{tpu_custom_call.1} parent=1 // pred_region
      %104 = dma.done [#allocation9], 512
    $region61: #{tpu_custom_call.1} parent=1 // pred_fallthru
      _
    %v105 = vld [vmem:[#allocation3] sm:$0xff]
    %v106 = vld [vmem:[#allocation3 + $0x8] sm:$0xff]
    %v107 = vld [vmem:[#allocation5] sm:$0xff]
    %v108 = vld [vmem:[#allocation5 + $0x8] sm:$0xff]
    %v109 = vld [vmem:[%s2] sm:$0x1]
    %v111 = vlaneseq
    %v112 = vshrl.u32 %v111, 7
    %v113 = vsub.s32 0, %v112
    %v114 = vrot.slane %v109, %v113
    %vm116 = vcmask 130048
    %v118 = vsel %vm116, %v105, 0
    %v121 = vsel %vm116, %v106, 0
    %123 = vmatprep.subr.mxu0 0.0
    %124 = vmatpush1.msra.mxu0 0.0
    %125 = vmatprep.subr.mxu0 0.0
    %126 = vmatpush1.msra.mxu0 0.0
    %127 = vmatprep.subr.mxu0 0.0
    %128 = vmatpush1.msra.mxu0 0.0
    %129 = vmatprep.subr.mxu0 0.0
    %130 = vmatpush1.msra.mxu0 0.0
    %131 = vmatprep.subr.mxu0 0.0
    %132 = vmatpush1.msra.mxu0 0.0
    %133 = vmatprep.subr.mxu0 0.0
    %134 = vmatpush1.msra.mxu0 0.0
    %135 = vmatprep.subr.mxu0 0.0
    %136 = vmatpush1.msra.mxu0 0.0
    %137 = vmatprep.subr.mxu0 0.0
    %138 = vmatpush1.msra.mxu0 0.0
    %139 = vmatprep.subr.mxu0 0.0
    %140 = vmatpush1.msra.mxu0 0.0
    %141 = vmatprep.subr.mxu0 0.0
    %142 = vmatpush1.msra.mxu0 0.0
    %143 = vmatprep.subr.mxu0 0.0
    %144 = vmatpush1.msra.mxu0 0.0
    %145 = vmatprep.subr.mxu0 0.0
    %146 = vmatpush1.msra.mxu0 0.0
    %147 = vmatprep.subr.mxu0 0.0
    %148 = vmatpush1.msra.mxu0 0.0
    %149 = vmatprep.subr.mxu0 0.0
    %150 = vmatpush1.msra.mxu0 0.0
    %151 = vmatprep.subr.mxu0 0.0
    %152 = vmatpush1.msra.mxu0 %v108
    %153 = vmatprep.subr.mxu0 0.0
    %154 = vmatpush1.msra.mxu0 %v107
    %155 = vmatprep.subr.mxu0 0.0
    %156 = vmatpush2.msra.mxu0 0.0
    %157 = vmatprep.subr.mxu0 0.0
    %158 = vmatpush2.msra.mxu0 0.0
    %159 = vmatprep.subr.mxu0 0.0
    %160 = vmatpush2.msra.mxu0 0.0
    %161 = vmatprep.subr.mxu0 0.0
    %162 = vmatpush2.msra.mxu0 0.0
    %163 = vmatprep.subr.mxu0 0.0
    %164 = vmatpush2.msra.mxu0 0.0
    %165 = vmatprep.subr.mxu0 0.0
    %166 = vmatpush2.msra.mxu0 0.0
    %167 = vmatprep.subr.mxu0 0.0
    %168 = vmatpush2.msra.mxu0 0.0
    %169 = vmatprep.subr.mxu0 0.0
    %170 = vmatpush2.msra.mxu0 0.0
    %171 = vmatprep.subr.mxu0 0.0
    %172 = vmatpush2.msra.mxu0 0.0
    %173 = vmatprep.subr.mxu0 0.0
    %174 = vmatpush2.msra.mxu0 0.0
    %175 = vmatprep.subr.mxu0 0.0
    %176 = vmatpush2.msra.mxu0 0.0
    %177 = vmatprep.subr.mxu0 0.0
    %178 = vmatpush2.msra.mxu0 0.0
    %179 = vmatprep.subr.mxu0 0.0
    %180 = vmatpush2.msra.mxu0 0.0
    %181 = vmatprep.subr.mxu0 0.0
    %182 = vmatpush2.msra.mxu0 0.0
    %183 = vmatprep.subr.mxu0 0.0
    %184 = vmatpush2.msra.mxu0 0.0
    %185 = vmatprep.subr.mxu0 0.0
    %186 = vmatpush2.msra.mxu0 0.0
    %187 = vmatprep.mubr.f32.mxu0 0.0
    %188 = vmatmul.mubr.f32.gmra.mxu0 %v118
    %v189 = vpop.f32.mrf.mxu0
    %v190 = vadd.f32 %v114, %v189
    %v191 = vpop.f32.mrf.mxu0
    %192 = vmatprep.mubr.f32.mxu0 0.0
    %193 = vmatmul.mubr.f32.gmra.mxu0 %v121
    %v194 = vpop.f32.mrf.mxu0
    %v195 = vadd.f32 %v114, %v194
    %v196 = vpop.f32.mrf.mxu0
    %197 = vdwg.mxu0
    %v198 = vld [vmem:[#allocation7] sm:$0xff]
    %v199 = vld [vmem:[#allocation7 + $0x8] sm:$0xff]
    %v200 = vld [vmem:[#allocation7 + $0x10] sm:$0xff]
    %v201 = vld [vmem:[#allocation7 + $0x18] sm:$0xff]
    %v202 = vld [vmem:[#allocation8] sm:$0xff]
    %v203 = vld [vmem:[#allocation8 + $0x8] sm:$0xff]
    %v204 = vld [vmem:[#allocation8 + $0x10] sm:$0xff]
    %v205 = vld [vmem:[#allocation8 + $0x18] sm:$0xff]
    %v206 = vld [vmem:[#allocation10] sm:$0xff]
    %v207 = vld [vmem:[#allocation10 + $0x8] sm:$0xff]
    %v208 = vld [vmem:[#allocation10 + $0x10] sm:$0xff]
    %v209 = vld [vmem:[#allocation10 + $0x18] sm:$0xff]
    %v210 = vld [vmem:[%s6] sm:$0x1]
    %v212 = vlaneseq
    %v213 = vshrl.u32 %v212, 7
    %v214 = vsub.s32 0, %v213
    %v215 = vrot.slane %v210, %v214
    %v217 = vld [vmem:[%s7] sm:$0x1]
    %v219 = vlaneseq
    %v220 = vshrl.u32 %v219, 7
    %v221 = vsub.s32 0, %v220
    %v222 = vrot.slane %v217, %v221
    %v224 = vadd.f32 %v190, 0.0
    %v225 = vadd.f32 %v195, 0.0
    %v226 = vtanh.pop %v224
    %v227 = vtanh.pop %v225
    %v230 = vrot.slane %v227, 7
    %vm231 = vcmask 1041409
    %v232 = vsel %vm231, %v230, %v226
    %vm233 = vcmask 261120
    %v234 = vsel %vm233, %v232, 0
    %236 = vmatprep.subr.mxu0 0.0
    %237 = vmatpush1.msra.mxu0 0.0
    %238 = vmatprep.subr.mxu0 0.0
    %239 = vmatpush1.msra.mxu0 0.0
    %240 = vmatprep.subr.mxu0 0.0
    %241 = vmatpush1.msra.mxu0 0.0
    %242 = vmatprep.subr.mxu0 0.0
    %243 = vmatpush1.msra.mxu0 0.0
    %244 = vmatprep.subr.mxu0 0.0
    %245 = vmatpush1.msra.mxu0 0.0
    %246 = vmatprep.subr.mxu0 0.0
    %247 = vmatpush1.msra.mxu0 0.0
    %248 = vmatprep.subr.mxu0 0.0
    %249 = vmatpush1.msra.mxu0 0.0
    %250 = vmatprep.subr.mxu0 0.0
    %251 = vmatpush1.msra.mxu0 0.0
    %252 = vmatprep.subr.mxu0 0.0
    %253 = vmatpush1.msra.mxu0 0.0
    %254 = vmatprep.subr.mxu0 0.0
    %255 = vmatpush1.msra.mxu0 0.0
    %256 = vmatprep.subr.mxu0 0.0
    %257 = vmatpush1.msra.mxu0 0.0
    %258 = vmatprep.subr.mxu0 0.0
    %259 = vmatpush1.msra.mxu0 0.0
    %260 = vmatprep.subr.mxu0 0.0
    %261 = vmatpush1.msra.mxu0 %v201
    %262 = vmatprep.subr.mxu0 0.0
    %263 = vmatpush1.msra.mxu0 %v200
    %264 = vmatprep.subr.mxu0 0.0
    %265 = vmatpush1.msra.mxu0 %v199
    %266 = vmatprep.subr.mxu0 0.0
    %267 = vmatpush1.msra.mxu0 %v198
    %268 = vmatprep.subr.mxu0 0.0
    %269 = vmatpush2.msra.mxu0 0.0
    %270 = vmatprep.subr.mxu0 0.0
    %271 = vmatpush2.msra.mxu0 0.0
    %272 = vmatprep.subr.mxu0 0.0
    %273 = vmatpush2.msra.mxu0 0.0
    %274 = vmatprep.subr.mxu0 0.0
    %275 = vmatpush2.msra.mxu0 0.0
    %276 = vmatprep.subr.mxu0 0.0
    %277 = vmatpush2.msra.mxu0 0.0
    %278 = vmatprep.subr.mxu0 0.0
    %279 = vmatpush2.msra.mxu0 0.0
    %280 = vmatprep.subr.mxu0 0.0
    %281 = vmatpush2.msra.mxu0 0.0
    %282 = vmatprep.subr.mxu0 0.0
    %283 = vmatpush2.msra.mxu0 0.0
    %284 = vmatprep.subr.mxu0 0.0
    %285 = vmatpush2.msra.mxu0 0.0
    %286 = vmatprep.subr.mxu0 0.0
    %287 = vmatpush2.msra.mxu0 0.0
    %288 = vmatprep.subr.mxu0 0.0
    %289 = vmatpush2.msra.mxu0 0.0
    %290 = vmatprep.subr.mxu0 0.0
    %291 = vmatpush2.msra.mxu0 0.0
    %292 = vmatprep.subr.mxu0 0.0
    %293 = vmatpush2.msra.mxu0 0.0
    %294 = vmatprep.subr.mxu0 0.0
    %295 = vmatpush2.msra.mxu0 0.0
    %296 = vmatprep.subr.mxu0 0.0
    %297 = vmatpush2.msra.mxu0 0.0
    %298 = vmatprep.subr.mxu0 0.0
    %299 = vmatpush2.msra.mxu0 0.0
    %300 = vmatprep.mubr.f32.mxu0 0.0
    %301 = vmatmul.mubr.f32.gmra.mxu0 %v234
    %v302 = vpop.f32.mrf.mxu0
    %v303 = vadd.f32 0.0, %v302
    %v304 = vpop.f32.mrf.mxu0
    %305 = vdwg.mxu0
    %v306 = vadd.f32 %v215, 0.0
    %308 = vrot.lane.b32.xlu0 %v303, 96
    %v309 = vpop.permute.xlu0 %308
    %v311 = vadd.f32 %v306, %v309
    %v312 = vtanh.pop %v311
    %v314 = vsel %vm233, %v312, 0
    %316 = vmatprep.subr.mxu0 0.0
    %317 = vmatpush1.msra.mxu0 0.0
    %318 = vmatprep.subr.mxu0 0.0
    %319 = vmatpush1.msra.mxu0 0.0
    %320 = vmatprep.subr.mxu0 0.0
    %321 = vmatpush1.msra.mxu0 0.0
    %322 = vmatprep.subr.mxu0 0.0
    %323 = vmatpush1.msra.mxu0 0.0
    %324 = vmatprep.subr.mxu0 0.0
    %325 = vmatpush1.msra.mxu0 0.0
    %326 = vmatprep.subr.mxu0 0.0
    %327 = vmatpush1.msra.mxu0 0.0
    %328 = vmatprep.subr.mxu0 0.0
    %329 = vmatpush1.msra.mxu0 0.0
    %330 = vmatprep.subr.mxu0 0.0
    %331 = vmatpush1.msra.mxu0 0.0
    %332 = vmatprep.subr.mxu0 0.0
    %333 = vmatpush1.msra.mxu0 0.0
    %334 = vmatprep.subr.mxu0 0.0
    %335 = vmatpush1.msra.mxu0 0.0
    %336 = vmatprep.subr.mxu0 0.0
    %337 = vmatpush1.msra.mxu0 0.0
    %338 = vmatprep.subr.mxu0 0.0
    %339 = vmatpush1.msra.mxu0 0.0
    %340 = vmatprep.subr.mxu0 0.0
    %341 = vmatpush1.msra.mxu0 %v205
    %342 = vmatprep.subr.mxu0 0.0
    %343 = vmatpush1.msra.mxu0 %v204
    %344 = vmatprep.subr.mxu0 0.0
    %345 = vmatpush1.msra.mxu0 %v203
    %346 = vmatprep.subr.mxu0 0.0
    %347 = vmatpush1.msra.mxu0 %v202
    %348 = vmatprep.subr.mxu0 0.0
    %349 = vmatpush2.msra.mxu0 0.0
    %350 = vmatprep.subr.mxu0 0.0
    %351 = vmatpush2.msra.mxu0 0.0
    %352 = vmatprep.subr.mxu0 0.0
    %353 = vmatpush2.msra.mxu0 0.0
    %354 = vmatprep.subr.mxu0 0.0
    %355 = vmatpush2.msra.mxu0 0.0
    %356 = vmatprep.subr.mxu0 0.0
    %357 = vmatpush2.msra.mxu0 0.0
    %358 = vmatprep.subr.mxu0 0.0
    %359 = vmatpush2.msra.mxu0 0.0
    %360 = vmatprep.subr.mxu0 0.0
    %361 = vmatpush2.msra.mxu0 0.0
    %362 = vmatprep.subr.mxu0 0.0
    %363 = vmatpush2.msra.mxu0 0.0
    %364 = vmatprep.subr.mxu0 0.0
    %365 = vmatpush2.msra.mxu0 0.0
    %366 = vmatprep.subr.mxu0 0.0
    %367 = vmatpush2.msra.mxu0 0.0
    %368 = vmatprep.subr.mxu0 0.0
    %369 = vmatpush2.msra.mxu0 0.0
    %370 = vmatprep.subr.mxu0 0.0
    %371 = vmatpush2.msra.mxu0 0.0
    %372 = vmatprep.subr.mxu0 0.0
    %373 = vmatpush2.msra.mxu0 0.0
    %374 = vmatprep.subr.mxu0 0.0
    %375 = vmatpush2.msra.mxu0 0.0
    %376 = vmatprep.subr.mxu0 0.0
    %377 = vmatpush2.msra.mxu0 0.0
    %378 = vmatprep.subr.mxu0 0.0
    %379 = vmatpush2.msra.mxu0 0.0
    %380 = vmatprep.mubr.f32.mxu0 0.0
    %381 = vmatmul.mubr.f32.gmra.mxu0 %v314
    %v382 = vpop.f32.mrf.mxu0
    %v383 = vadd.f32 0.0, %v382
    %v384 = vpop.f32.mrf.mxu0
    %385 = vdwg.mxu0
    %v386 = vadd.f32 %v222, 0.0
    %388 = vrot.lane.b32.xlu0 %v383, 96
    %v389 = vpop.permute.xlu0 %388
    %v391 = vadd.f32 %v386, %v389
    %v392 = vtanh.pop %v391
    %v393 = vrot.slane %v303, 7
    %v396 = vadd.f32 %v190, %v393
    %v397 = vadd.f32 %v195, %v303
    %v398 = vtanh.pop %v396
    %v399 = vtanh.pop %v397
    %v402 = vrot.slane %v398, 1
    %v403 = vsel %vm231, %v399, %v402
    %v404 = vsel %vm233, %v403, 0
    %406 = vmatprep.subr.mxu0 0.0
    %407 = vmatpush1.msra.mxu0 0.0
    %408 = vmatprep.subr.mxu0 0.0
    %409 = vmatpush1.msra.mxu0 0.0
    %410 = vmatprep.subr.mxu0 0.0
    %411 = vmatpush1.msra.mxu0 0.0
    %412 = vmatprep.subr.mxu0 0.0
    %413 = vmatpush1.msra.mxu0 0.0
    %414 = vmatprep.subr.mxu0 0.0
    %415 = vmatpush1.msra.mxu0 0.0
    %416 = vmatprep.subr.mxu0 0.0
    %417 = vmatpush1.msra.mxu0 0.0
    %418 = vmatprep.subr.mxu0 0.0
    %419 = vmatpush1.msra.mxu0 0.0
    %420 = vmatprep.subr.mxu0 0.0
    %421 = vmatpush1.msra.mxu0 0.0
    %422 = vmatprep.subr.mxu0 0.0
    %423 = vmatpush1.msra.mxu0 0.0
    %424 = vmatprep.subr.mxu0 0.0
    %425 = vmatpush1.msra.mxu0 0.0
    %426 = vmatprep.subr.mxu0 0.0
    %427 = vmatpush1.msra.mxu0 0.0
    %428 = vmatprep.subr.mxu0 0.0
    %429 = vmatpush1.msra.mxu0 0.0
    %430 = vmatprep.subr.mxu0 0.0
    %431 = vmatpush1.msra.mxu0 %v201
    %432 = vmatprep.subr.mxu0 0.0
    %433 = vmatpush1.msra.mxu0 %v200
    %434 = vmatprep.subr.mxu0 0.0
    %435 = vmatpush1.msra.mxu0 %v199
    %436 = vmatprep.subr.mxu0 0.0
    %437 = vmatpush1.msra.mxu0 %v198
    %438 = vmatprep.subr.mxu0 0.0
    %439 = vmatpush2.msra.mxu0 0.0
    %440 = vmatprep.subr.mxu0 0.0
    %441 = vmatpush2.msra.mxu0 0.0
    %442 = vmatprep.subr.mxu0 0.0
    %443 = vmatpush2.msra.mxu0 0.0
    %444 = vmatprep.subr.mxu0 0.0
    %445 = vmatpush2.msra.mxu0 0.0
    %446 = vmatprep.subr.mxu0 0.0
    %447 = vmatpush2.msra.mxu0 0.0
    %448 = vmatprep.subr.mxu0 0.0
    %449 = vmatpush2.msra.mxu0 0.0
    %450 = vmatprep.subr.mxu0 0.0
    %451 = vmatpush2.msra.mxu0 0.0
    %452 = vmatprep.subr.mxu0 0.0
    %453 = vmatpush2.msra.mxu0 0.0
    %454 = vmatprep.subr.mxu0 0.0
    %455 = vmatpush2.msra.mxu0 0.0
    %456 = vmatprep.subr.mxu0 0.0
    %457 = vmatpush2.msra.mxu0 0.0
    %458 = vmatprep.subr.mxu0 0.0
    %459 = vmatpush2.msra.mxu0 0.0
    %460 = vmatprep.subr.mxu0 0.0
    %461 = vmatpush2.msra.mxu0 0.0
    %462 = vmatprep.subr.mxu0 0.0
    %463 = vmatpush2.msra.mxu0 0.0
    %464 = vmatprep.subr.mxu0 0.0
    %465 = vmatpush2.msra.mxu0 0.0
    %466 = vmatprep.subr.mxu0 0.0
    %467 = vmatpush2.msra.mxu0 0.0
    %468 = vmatprep.subr.mxu0 0.0
    %469 = vmatpush2.msra.mxu0 0.0
    %470 = vmatprep.mubr.f32.mxu0 0.0
    %471 = vmatmul.mubr.f32.gmra.mxu0 %v404
    %v472 = vpop.f32.mrf.mxu0
    %v473 = vadd.f32 0.0, %v472
    %v474 = vpop.f32.mrf.mxu0
    %475 = vdwg.mxu0
    %v476 = vadd.f32 %v383, %v215
    %478 = vrot.lane.b32.xlu0 %v473, 96
    %v479 = vpop.permute.xlu0 %478
    %v481 = vadd.f32 %v476, %v479
    %v482 = vtanh.pop %v481
    %v484 = vsel %vm233, %v482, 0
    %486 = vmatprep.subr.mxu0 0.0
    %487 = vmatpush1.msra.mxu0 0.0
    %488 = vmatprep.subr.mxu0 0.0
    %489 = vmatpush1.msra.mxu0 0.0
    %490 = vmatprep.subr.mxu0 0.0
    %491 = vmatpush1.msra.mxu0 0.0
    %492 = vmatprep.subr.mxu0 0.0
    %493 = vmatpush1.msra.mxu0 0.0
    %494 = vmatprep.subr.mxu0 0.0
    %495 = vmatpush1.msra.mxu0 0.0
    %496 = vmatprep.subr.mxu0 0.0
    %497 = vmatpush1.msra.mxu0 0.0
    %498 = vmatprep.subr.mxu0 0.0
    %499 = vmatpush1.msra.mxu0 0.0
    %500 = vmatprep.subr.mxu0 0.0
    %501 = vmatpush1.msra.mxu0 0.0
    %502 = vmatprep.subr.mxu0 0.0
    %503 = vmatpush1.msra.mxu0 0.0
    %504 = vmatprep.subr.mxu0 0.0
    %505 = vmatpush1.msra.mxu0 0.0
    %506 = vmatprep.subr.mxu0 0.0
    %507 = vmatpush1.msra.mxu0 0.0
    %508 = vmatprep.subr.mxu0 0.0
    %509 = vmatpush1.msra.mxu0 0.0
    %510 = vmatprep.subr.mxu0 0.0
    %511 = vmatpush1.msra.mxu0 %v205
    %512 = vmatprep.subr.mxu0 0.0
    %513 = vmatpush1.msra.mxu0 %v204
    %514 = vmatprep.subr.mxu0 0.0
    %515 = vmatpush1.msra.mxu0 %v203
    %516 = vmatprep.subr.mxu0 0.0
    %517 = vmatpush1.msra.mxu0 %v202
    %518 = vmatprep.subr.mxu0 0.0
    %519 = vmatpush2.msra.mxu0 0.0
    %520 = vmatprep.subr.mxu0 0.0
    %521 = vmatpush2.msra.mxu0 0.0
    %522 = vmatprep.subr.mxu0 0.0
    %523 = vmatpush2.msra.mxu0 0.0
    %524 = vmatprep.subr.mxu0 0.0
    %525 = vmatpush2.msra.mxu0 0.0
    %526 = vmatprep.subr.mxu0 0.0
    %527 = vmatpush2.msra.mxu0 0.0
    %528 = vmatprep.subr.mxu0 0.0
    %529 = vmatpush2.msra.mxu0 0.0
    %530 = vmatprep.subr.mxu0 0.0
    %531 = vmatpush2.msra.mxu0 0.0
    %532 = vmatprep.subr.mxu0 0.0
    %533 = vmatpush2.msra.mxu0 0.0
    %534 = vmatprep.subr.mxu0 0.0
    %535 = vmatpush2.msra.mxu0 0.0
    %536 = vmatprep.subr.mxu0 0.0
    %537 = vmatpush2.msra.mxu0 0.0
    %538 = vmatprep.subr.mxu0 0.0
    %539 = vmatpush2.msra.mxu0 0.0
    %540 = vmatprep.subr.mxu0 0.0
    %541 = vmatpush2.msra.mxu0 0.0
    %542 = vmatprep.subr.mxu0 0.0
    %543 = vmatpush2.msra.mxu0 0.0
    %544 = vmatprep.subr.mxu0 0.0
    %545 = vmatpush2.msra.mxu0 0.0
    %546 = vmatprep.subr.mxu0 0.0
    %547 = vmatpush2.msra.mxu0 0.0
    %548 = vmatprep.subr.mxu0 0.0
    %549 = vmatpush2.msra.mxu0 0.0
    %550 = vmatprep.mubr.f32.mxu0 0.0
    %551 = vmatmul.mubr.f32.gmra.mxu0 %v484
    %v552 = vpop.f32.mrf.mxu0
    %v553 = vadd.f32 0.0, %v552
    %v554 = vpop.f32.mrf.mxu0
    %555 = vdwg.mxu0
    %v557 = vsel %vm233, %v392, 0
    %559 = vmatprep.subr.mxu0 0.0
    %560 = vmatpush1.msra.mxu0 0.0
    %561 = vmatprep.subr.mxu0 0.0
    %562 = vmatpush1.msra.mxu0 0.0
    %563 = vmatprep.subr.mxu0 0.0
    %564 = vmatpush1.msra.mxu0 0.0
    %565 = vmatprep.subr.mxu0 0.0
    %566 = vmatpush1.msra.mxu0 0.0
    %567 = vmatprep.subr.mxu0 0.0
    %568 = vmatpush1.msra.mxu0 0.0
    %569 = vmatprep.subr.mxu0 0.0
    %570 = vmatpush1.msra.mxu0 0.0
    %571 = vmatprep.subr.mxu0 0.0
    %572 = vmatpush1.msra.mxu0 0.0
    %573 = vmatprep.subr.mxu0 0.0
    %574 = vmatpush1.msra.mxu0 0.0
    %575 = vmatprep.subr.mxu0 0.0
    %576 = vmatpush1.msra.mxu0 0.0
    %577 = vmatprep.subr.mxu0 0.0
    %578 = vmatpush1.msra.mxu0 0.0
    %579 = vmatprep.subr.mxu0 0.0
    %580 = vmatpush1.msra.mxu0 0.0
    %581 = vmatprep.subr.mxu0 0.0
    %582 = vmatpush1.msra.mxu0 0.0
    %583 = vmatprep.subr.mxu0 0.0
    %584 = vmatpush1.msra.mxu0 %v209
    %585 = vmatprep.subr.mxu0 0.0
    %586 = vmatpush1.msra.mxu0 %v208
    %587 = vmatprep.subr.mxu0 0.0
    %588 = vmatpush1.msra.mxu0 %v207
    %589 = vmatprep.subr.mxu0 0.0
    %590 = vmatpush1.msra.mxu0 %v206
    %591 = vmatprep.subr.mxu0 0.0
    %592 = vmatpush2.msra.mxu0 0.0
    %593 = vmatprep.subr.mxu0 0.0
    %594 = vmatpush2.msra.mxu0 0.0
    %595 = vmatprep.subr.mxu0 0.0
    %596 = vmatpush2.msra.mxu0 0.0
    %597 = vmatprep.subr.mxu0 0.0
    %598 = vmatpush2.msra.mxu0 0.0
    %599 = vmatprep.subr.mxu0 0.0
    %600 = vmatpush2.msra.mxu0 0.0
    %601 = vmatprep.subr.mxu0 0.0
    %602 = vmatpush2.msra.mxu0 0.0
    %603 = vmatprep.subr.mxu0 0.0
    %604 = vmatpush2.msra.mxu0 0.0
    %605 = vmatprep.subr.mxu0 0.0
    %606 = vmatpush2.msra.mxu0 0.0
    %607 = vmatprep.subr.mxu0 0.0
    %608 = vmatpush2.msra.mxu0 0.0
    %609 = vmatprep.subr.mxu0 0.0
    %610 = vmatpush2.msra.mxu0 0.0
    %611 = vmatprep.subr.mxu0 0.0
    %612 = vmatpush2.msra.mxu0 0.0
    %613 = vmatprep.subr.mxu0 0.0
    %614 = vmatpush2.msra.mxu0 0.0
    %615 = vmatprep.subr.mxu0 0.0
    %616 = vmatpush2.msra.mxu0 0.0
    %617 = vmatprep.subr.mxu0 0.0
    %618 = vmatpush2.msra.mxu0 0.0
    %619 = vmatprep.subr.mxu0 0.0
    %620 = vmatpush2.msra.mxu0 0.0
    %621 = vmatprep.subr.mxu0 0.0
    %622 = vmatpush2.msra.mxu0 0.0
    %623 = vmatprep.mubr.f32.mxu0 0.0
    %624 = vmatmul.mubr.f32.gmra.mxu0 %v557
    %v625 = vpop.f32.mrf.mxu0
    %v626 = vadd.f32 %v222, %v625
    %v627 = vpop.f32.mrf.mxu0
    %628 = vdwg.mxu0
    %630 = vrot.lane.b32.xlu0 %v553, 96
    %v631 = vpop.permute.xlu0 %630
    %v633 = vadd.f32 %v626, %v631
    %v634 = vtanh.pop %v633
    %v635 = vrot.slane %v473, 6
    %v636 = vrot.slane %v473, 7
    %v639 = vadd.f32 %v190, %v635
    %v640 = vadd.f32 %v195, %v636
    %v641 = vtanh.pop %v639
    %v642 = vtanh.pop %v640
    %v645 = vrot.slane %v641, 2
    %v646 = vrot.slane %v642, 1
    %v647 = vsel %vm231, %v646, %v645
    %v648 = vsel %vm233, %v647, 0
    %650 = vmatprep.subr.mxu0 0.0
    %651 = vmatpush1.msra.mxu0 0.0
    %652 = vmatprep.subr.mxu0 0.0
    %653 = vmatpush1.msra.mxu0 0.0
    %654 = vmatprep.subr.mxu0 0.0
    %655 = vmatpush1.msra.mxu0 0.0
    %656 = vmatprep.subr.mxu0 0.0
    %657 = vmatpush1.msra.mxu0 0.0
    %658 = vmatprep.subr.mxu0 0.0
    %659 = vmatpush1.msra.mxu0 0.0
    %660 = vmatprep.subr.mxu0 0.0
    %661 = vmatpush1.msra.mxu0 0.0
    %662 = vmatprep.subr.mxu0 0.0
    %663 = vmatpush1.msra.mxu0 0.0
    %664 = vmatprep.subr.mxu0 0.0
    %665 = vmatpush1.msra.mxu0 0.0
    %666 = vmatprep.subr.mxu0 0.0
    %667 = vmatpush1.msra.mxu0 0.0
    %668 = vmatprep.subr.mxu0 0.0
    %669 = vmatpush1.msra.mxu0 0.0
    %670 = vmatprep.subr.mxu0 0.0
    %671 = vmatpush1.msra.mxu0 0.0
    %672 = vmatprep.subr.mxu0 0.0
    %673 = vmatpush1.msra.mxu0 0.0
    %674 = vmatprep.subr.mxu0 0.0
    %675 = vmatpush1.msra.mxu0 %v201
    %676 = vmatprep.subr.mxu0 0.0
    %677 = vmatpush1.msra.mxu0 %v200
    %678 = vmatprep.subr.mxu0 0.0
    %679 = vmatpush1.msra.mxu0 %v199
    %680 = vmatprep.subr.mxu0 0.0
    %681 = vmatpush1.msra.mxu0 %v198
    %682 = vmatprep.subr.mxu0 0.0
    %683 = vmatpush2.msra.mxu0 0.0
    %684 = vmatprep.subr.mxu0 0.0
    %685 = vmatpush2.msra.mxu0 0.0
    %686 = vmatprep.subr.mxu0 0.0
    %687 = vmatpush2.msra.mxu0 0.0
    %688 = vmatprep.subr.mxu0 0.0
    %689 = vmatpush2.msra.mxu0 0.0
    %690 = vmatprep.subr.mxu0 0.0
    %691 = vmatpush2.msra.mxu0 0.0
    %692 = vmatprep.subr.mxu0 0.0
    %693 = vmatpush2.msra.mxu0 0.0
    %694 = vmatprep.subr.mxu0 0.0
    %695 = vmatpush2.msra.mxu0 0.0
    %696 = vmatprep.subr.mxu0 0.0
    %697 = vmatpush2.msra.mxu0 0.0
    %698 = vmatprep.subr.mxu0 0.0
    %699 = vmatpush2.msra.mxu0 0.0
    %700 = vmatprep.subr.mxu0 0.0
    %701 = vmatpush2.msra.mxu0 0.0
    %702 = vmatprep.subr.mxu0 0.0
    %703 = vmatpush2.msra.mxu0 0.0
    %704 = vmatprep.subr.mxu0 0.0
    %705 = vmatpush2.msra.mxu0 0.0
    %706 = vmatprep.subr.mxu0 0.0
    %707 = vmatpush2.msra.mxu0 0.0
    %708 = vmatprep.subr.mxu0 0.0
    %709 = vmatpush2.msra.mxu0 0.0
    %710 = vmatprep.subr.mxu0 0.0
    %711 = vmatpush2.msra.mxu0 0.0
    %712 = vmatprep.subr.mxu0 0.0
    %713 = vmatpush2.msra.mxu0 0.0
    %714 = vmatprep.mubr.f32.mxu0 0.0
    %715 = vmatmul.mubr.f32.gmra.mxu0 %v648
    %v716 = vpop.f32.mrf.mxu0
    %v717 = vadd.f32 0.0, %v716
    %v718 = vpop.f32.mrf.mxu0
    %719 = vdwg.mxu0
    %v720 = vadd.f32 %v553, %v215
    %722 = vrot.lane.b32.xlu0 %v717, 96
    %v723 = vpop.permute.xlu0 %722
    %v725 = vadd.f32 %v720, %v723
    %v726 = vtanh.pop %v725
    %v728 = vsel %vm233, %v726, 0
    %730 = vmatprep.subr.mxu0 0.0
    %731 = vmatpush1.msra.mxu0 0.0
    %732 = vmatprep.subr.mxu0 0.0
    %733 = vmatpush1.msra.mxu0 0.0
    %734 = vmatprep.subr.mxu0 0.0
    %735 = vmatpush1.msra.mxu0 0.0
    %736 = vmatprep.subr.mxu0 0.0
    %737 = vmatpush1.msra.mxu0 0.0
    %738 = vmatprep.subr.mxu0 0.0
    %739 = vmatpush1.msra.mxu0 0.0
    %740 = vmatprep.subr.mxu0 0.0
    %741 = vmatpush1.msra.mxu0 0.0
    %742 = vmatprep.subr.mxu0 0.0
    %743 = vmatpush1.msra.mxu0 0.0
    %744 = vmatprep.subr.mxu0 0.0
    %745 = vmatpush1.msra.mxu0 0.0
    %746 = vmatprep.subr.mxu0 0.0
    %747 = vmatpush1.msra.mxu0 0.0
    %748 = vmatprep.subr.mxu0 0.0
    %749 = vmatpush1.msra.mxu0 0.0
    %750 = vmatprep.subr.mxu0 0.0
    %751 = vmatpush1.msra.mxu0 0.0
    %752 = vmatprep.subr.mxu0 0.0
    %753 = vmatpush1.msra.mxu0 0.0
    %754 = vmatprep.subr.mxu0 0.0
    %755 = vmatpush1.msra.mxu0 %v205
    %756 = vmatprep.subr.mxu0 0.0
    %757 = vmatpush1.msra.mxu0 %v204
    %758 = vmatprep.subr.mxu0 0.0
    %759 = vmatpush1.msra.mxu0 %v203
    %760 = vmatprep.subr.mxu0 0.0
    %761 = vmatpush1.msra.mxu0 %v202
    %762 = vmatprep.subr.mxu0 0.0
    %763 = vmatpush2.msra.mxu0 0.0
    %764 = vmatprep.subr.mxu0 0.0
    %765 = vmatpush2.msra.mxu0 0.0
    %766 = vmatprep.subr.mxu0 0.0
    %767 = vmatpush2.msra.mxu0 0.0
    %768 = vmatprep.subr.mxu0 0.0
    %769 = vmatpush2.msra.mxu0 0.0
    %770 = vmatprep.subr.mxu0 0.0
    %771 = vmatpush2.msra.mxu0 0.0
    %772 = vmatprep.subr.mxu0 0.0
    %773 = vmatpush2.msra.mxu0 0.0
    %774 = vmatprep.subr.mxu0 0.0
    %775 = vmatpush2.msra.mxu0 0.0
    %776 = vmatprep.subr.mxu0 0.0
    %777 = vmatpush2.msra.mxu0 0.0
    %778 = vmatprep.subr.mxu0 0.0
    %779 = vmatpush2.msra.mxu0 0.0
    %780 = vmatprep.subr.mxu0 0.0
    %781 = vmatpush2.msra.mxu0 0.0
    %782 = vmatprep.subr.mxu0 0.0
    %783 = vmatpush2.msra.mxu0 0.0
    %784 = vmatprep.subr.mxu0 0.0
    %785 = vmatpush2.msra.mxu0 0.0
    %786 = vmatprep.subr.mxu0 0.0
    %787 = vmatpush2.msra.mxu0 0.0
    %788 = vmatprep.subr.mxu0 0.0
    %789 = vmatpush2.msra.mxu0 0.0
    %790 = vmatprep.subr.mxu0 0.0
    %791 = vmatpush2.msra.mxu0 0.0
    %792 = vmatprep.subr.mxu0 0.0
    %793 = vmatpush2.msra.mxu0 0.0
    %794 = vmatprep.mubr.f32.mxu0 0.0
    %795 = vmatmul.mubr.f32.gmra.mxu0 %v728
    %v796 = vpop.f32.mrf.mxu0
    %v797 = vadd.f32 0.0, %v796
    %v798 = vpop.f32.mrf.mxu0
    %799 = vdwg.mxu0
    %v801 = vsel %vm233, %v634, 0
    %803 = vmatprep.subr.mxu0 0.0
    %804 = vmatpush1.msra.mxu0 0.0
    %805 = vmatprep.subr.mxu0 0.0
    %806 = vmatpush1.msra.mxu0 0.0
    %807 = vmatprep.subr.mxu0 0.0
    %808 = vmatpush1.msra.mxu0 0.0
    %809 = vmatprep.subr.mxu0 0.0
    %810 = vmatpush1.msra.mxu0 0.0
    %811 = vmatprep.subr.mxu0 0.0
    %812 = vmatpush1.msra.mxu0 0.0
    %813 = vmatprep.subr.mxu0 0.0
    %814 = vmatpush1.msra.mxu0 0.0
    %815 = vmatprep.subr.mxu0 0.0
    %816 = vmatpush1.msra.mxu0 0.0
    %817 = vmatprep.subr.mxu0 0.0
    %818 = vmatpush1.msra.mxu0 0.0
    %819 = vmatprep.subr.mxu0 0.0
    %820 = vmatpush1.msra.mxu0 0.0
    %821 = vmatprep.subr.mxu0 0.0
    %822 = vmatpush1.msra.mxu0 0.0
    %823 = vmatprep.subr.mxu0 0.0
    %824 = vmatpush1.msra.mxu0 0.0
    %825 = vmatprep.subr.mxu0 0.0
    %826 = vmatpush1.msra.mxu0 0.0
    %827 = vmatprep.subr.mxu0 0.0
    %828 = vmatpush1.msra.mxu0 %v209
    %829 = vmatprep.subr.mxu0 0.0
    %830 = vmatpush1.msra.mxu0 %v208
    %831 = vmatprep.subr.mxu0 0.0
    %832 = vmatpush1.msra.mxu0 %v207
    %833 = vmatprep.subr.mxu0 0.0
    %834 = vmatpush1.msra.mxu0 %v206
    %835 = vmatprep.subr.mxu0 0.0
    %836 = vmatpush2.msra.mxu0 0.0
    %837 = vmatprep.subr.mxu0 0.0
    %838 = vmatpush2.msra.mxu0 0.0
    %839 = vmatprep.subr.mxu0 0.0
    %840 = vmatpush2.msra.mxu0 0.0
    %841 = vmatprep.subr.mxu0 0.0
    %842 = vmatpush2.msra.mxu0 0.0
    %843 = vmatprep.subr.mxu0 0.0
    %844 = vmatpush2.msra.mxu0 0.0
    %845 = vmatprep.subr.mxu0 0.0
    %846 = vmatpush2.msra.mxu0 0.0
    %847 = vmatprep.subr.mxu0 0.0
    %848 = vmatpush2.msra.mxu0 0.0
    %849 = vmatprep.subr.mxu0 0.0
    %850 = vmatpush2.msra.mxu0 0.0
    %851 = vmatprep.subr.mxu0 0.0
    %852 = vmatpush2.msra.mxu0 0.0
    %853 = vmatprep.subr.mxu0 0.0
    %854 = vmatpush2.msra.mxu0 0.0
    %855 = vmatprep.subr.mxu0 0.0
    %856 = vmatpush2.msra.mxu0 0.0
    %857 = vmatprep.subr.mxu0 0.0
    %858 = vmatpush2.msra.mxu0 0.0
    %859 = vmatprep.subr.mxu0 0.0
    %860 = vmatpush2.msra.mxu0 0.0
    %861 = vmatprep.subr.mxu0 0.0
    %862 = vmatpush2.msra.mxu0 0.0
    %863 = vmatprep.subr.mxu0 0.0
    %864 = vmatpush2.msra.mxu0 0.0
    %865 = vmatprep.subr.mxu0 0.0
    %866 = vmatpush2.msra.mxu0 0.0
    %867 = vmatprep.mubr.f32.mxu0 0.0
    %868 = vmatmul.mubr.f32.gmra.mxu0 %v801
    %v869 = vpop.f32.mrf.mxu0
    %v870 = vadd.f32 %v222, %v869
    %v871 = vpop.f32.mrf.mxu0
    %872 = vdwg.mxu0
    %874 = vrot.lane.b32.xlu0 %v797, 96
    %v875 = vpop.permute.xlu0 %874
    %v877 = vadd.f32 %v870, %v875
    %v878 = vtanh.pop %v877
    %v879 = vrot.slane %v717, 5
    %v880 = vrot.slane %v717, 6
    %v883 = vadd.f32 %v190, %v879
    %v884 = vadd.f32 %v195, %v880
    %v885 = vtanh.pop %v883
    %v886 = vtanh.pop %v884
    %v889 = vrot.slane %v885, 3
    %v890 = vrot.slane %v886, 2
    %v891 = vsel %vm231, %v890, %v889
    %v892 = vsel %vm233, %v891, 0
    %894 = vmatprep.subr.mxu0 0.0
    %895 = vmatpush1.msra.mxu0 0.0
    %896 = vmatprep.subr.mxu0 0.0
    %897 = vmatpush1.msra.mxu0 0.0
    %898 = vmatprep.subr.mxu0 0.0
    %899 = vmatpush1.msra.mxu0 0.0
    %900 = vmatprep.subr.mxu0 0.0
    %901 = vmatpush1.msra.mxu0 0.0
    %902 = vmatprep.subr.mxu0 0.0
    %903 = vmatpush1.msra.mxu0 0.0
    %904 = vmatprep.subr.mxu0 0.0
    %905 = vmatpush1.msra.mxu0 0.0
    %906 = vmatprep.subr.mxu0 0.0
    %907 = vmatpush1.msra.mxu0 0.0
    %908 = vmatprep.subr.mxu0 0.0
    %909 = vmatpush1.msra.mxu0 0.0
    %910 = vmatprep.subr.mxu0 0.0
    %911 = vmatpush1.msra.mxu0 0.0
    %912 = vmatprep.subr.mxu0 0.0
    %913 = vmatpush1.msra.mxu0 0.0
    %914 = vmatprep.subr.mxu0 0.0
    %915 = vmatpush1.msra.mxu0 0.0
    %916 = vmatprep.subr.mxu0 0.0
    %917 = vmatpush1.msra.mxu0 0.0
    %918 = vmatprep.subr.mxu0 0.0
    %919 = vmatpush1.msra.mxu0 %v201
    %920 = vmatprep.subr.mxu0 0.0
    %921 = vmatpush1.msra.mxu0 %v200
    %922 = vmatprep.subr.mxu0 0.0
    %923 = vmatpush1.msra.mxu0 %v199
    %924 = vmatprep.subr.mxu0 0.0
    %925 = vmatpush1.msra.mxu0 %v198
    %926 = vmatprep.subr.mxu0 0.0
    %927 = vmatpush2.msra.mxu0 0.0
    %928 = vmatprep.subr.mxu0 0.0
    %929 = vmatpush2.msra.mxu0 0.0
    %930 = vmatprep.subr.mxu0 0.0
    %931 = vmatpush2.msra.mxu0 0.0
    %932 = vmatprep.subr.mxu0 0.0
    %933 = vmatpush2.msra.mxu0 0.0
    %934 = vmatprep.subr.mxu0 0.0
    %935 = vmatpush2.msra.mxu0 0.0
    %936 = vmatprep.subr.mxu0 0.0
    %937 = vmatpush2.msra.mxu0 0.0
    %938 = vmatprep.subr.mxu0 0.0
    %939 = vmatpush2.msra.mxu0 0.0
    %940 = vmatprep.subr.mxu0 0.0
    %941 = vmatpush2.msra.mxu0 0.0
    %942 = vmatprep.subr.mxu0 0.0
    %943 = vmatpush2.msra.mxu0 0.0
    %944 = vmatprep.subr.mxu0 0.0
    %945 = vmatpush2.msra.mxu0 0.0
    %946 = vmatprep.subr.mxu0 0.0
    %947 = vmatpush2.msra.mxu0 0.0
    %948 = vmatprep.subr.mxu0 0.0
    %949 = vmatpush2.msra.mxu0 0.0
    %950 = vmatprep.subr.mxu0 0.0
    %951 = vmatpush2.msra.mxu0 0.0
    %952 = vmatprep.subr.mxu0 0.0
    %953 = vmatpush2.msra.mxu0 0.0
    %954 = vmatprep.subr.mxu0 0.0
    %955 = vmatpush2.msra.mxu0 0.0
    %956 = vmatprep.subr.mxu0 0.0
    %957 = vmatpush2.msra.mxu0 0.0
    %958 = vmatprep.mubr.f32.mxu0 0.0
    %959 = vmatmul.mubr.f32.gmra.mxu0 %v892
    %v960 = vpop.f32.mrf.mxu0
    %v961 = vadd.f32 0.0, %v960
    %v962 = vpop.f32.mrf.mxu0
    %963 = vdwg.mxu0
    %v964 = vadd.f32 %v797, %v215
    %966 = vrot.lane.b32.xlu0 %v961, 96
    %v967 = vpop.permute.xlu0 %966
    %v969 = vadd.f32 %v964, %v967
    %v970 = vtanh.pop %v969
    %v972 = vsel %vm233, %v970, 0
    %974 = vmatprep.subr.mxu0 0.0
    %975 = vmatpush1.msra.mxu0 0.0
    %976 = vmatprep.subr.mxu0 0.0
    %977 = vmatpush1.msra.mxu0 0.0
    %978 = vmatprep.subr.mxu0 0.0
    %979 = vmatpush1.msra.mxu0 0.0
    %980 = vmatprep.subr.mxu0 0.0
    %981 = vmatpush1.msra.mxu0 0.0
    %982 = vmatprep.subr.mxu0 0.0
    %983 = vmatpush1.msra.mxu0 0.0
    %984 = vmatprep.subr.mxu0 0.0
    %985 = vmatpush1.msra.mxu0 0.0
    %986 = vmatprep.subr.mxu0 0.0
    %987 = vmatpush1.msra.mxu0 0.0
    %988 = vmatprep.subr.mxu0 0.0
    %989 = vmatpush1.msra.mxu0 0.0
    %990 = vmatprep.subr.mxu0 0.0
    %991 = vmatpush1.msra.mxu0 0.0
    %992 = vmatprep.subr.mxu0 0.0
    %993 = vmatpush1.msra.mxu0 0.0
    %994 = vmatprep.subr.mxu0 0.0
    %995 = vmatpush1.msra.mxu0 0.0
    %996 = vmatprep.subr.mxu0 0.0
    %997 = vmatpush1.msra.mxu0 0.0
    %998 = vmatprep.subr.mxu0 0.0
    %999 = vmatpush1.msra.mxu0 %v205
    %1000 = vmatprep.subr.mxu0 0.0
    %1001 = vmatpush1.msra.mxu0 %v204
    %1002 = vmatprep.subr.mxu0 0.0
    %1003 = vmatpush1.msra.mxu0 %v203
    %1004 = vmatprep.subr.mxu0 0.0
    %1005 = vmatpush1.msra.mxu0 %v202
    %1006 = vmatprep.subr.mxu0 0.0
    %1007 = vmatpush2.msra.mxu0 0.0
    %1008 = vmatprep.subr.mxu0 0.0
    %1009 = vmatpush2.msra.mxu0 0.0
    %1010 = vmatprep.subr.mxu0 0.0
    %1011 = vmatpush2.msra.mxu0 0.0
    %1012 = vmatprep.subr.mxu0 0.0
    %1013 = vmatpush2.msra.mxu0 0.0
    %1014 = vmatprep.subr.mxu0 0.0
    %1015 = vmatpush2.msra.mxu0 0.0
    %1016 = vmatprep.subr.mxu0 0.0
    %1017 = vmatpush2.msra.mxu0 0.0
    %1018 = vmatprep.subr.mxu0 0.0
    %1019 = vmatpush2.msra.mxu0 0.0
    %1020 = vmatprep.subr.mxu0 0.0
    %1021 = vmatpush2.msra.mxu0 0.0
    %1022 = vmatprep.subr.mxu0 0.0
    %1023 = vmatpush2.msra.mxu0 0.0
    %1024 = vmatprep.subr.mxu0 0.0
    %1025 = vmatpush2.msra.mxu0 0.0
    %1026 = vmatprep.subr.mxu0 0.0
    %1027 = vmatpush2.msra.mxu0 0.0
    %1028 = vmatprep.subr.mxu0 0.0
    %1029 = vmatpush2.msra.mxu0 0.0
    %1030 = vmatprep.subr.mxu0 0.0
    %1031 = vmatpush2.msra.mxu0 0.0
    %1032 = vmatprep.subr.mxu0 0.0
    %1033 = vmatpush2.msra.mxu0 0.0
    %1034 = vmatprep.subr.mxu0 0.0
    %1035 = vmatpush2.msra.mxu0 0.0
    %1036 = vmatprep.subr.mxu0 0.0
    %1037 = vmatpush2.msra.mxu0 0.0
    %1038 = vmatprep.mubr.f32.mxu0 0.0
    %1039 = vmatmul.mubr.f32.gmra.mxu0 %v972
    %v1040 = vpop.f32.mrf.mxu0
    %v1041 = vadd.f32 0.0, %v1040
    %v1042 = vpop.f32.mrf.mxu0
    %1043 = vdwg.mxu0
    %v1045 = vsel %vm233, %v878, 0
    %1047 = vmatprep.subr.mxu0 0.0
    %1048 = vmatpush1.msra.mxu0 0.0
    %1049 = vmatprep.subr.mxu0 0.0
    %1050 = vmatpush1.msra.mxu0 0.0
    %1051 = vmatprep.subr.mxu0 0.0
    %1052 = vmatpush1.msra.mxu0 0.0
    %1053 = vmatprep.subr.mxu0 0.0
    %1054 = vmatpush1.msra.mxu0 0.0
    %1055 = vmatprep.subr.mxu0 0.0
    %1056 = vmatpush1.msra.mxu0 0.0
    %1057 = vmatprep.subr.mxu0 0.0
    %1058 = vmatpush1.msra.mxu0 0.0
    %1059 = vmatprep.subr.mxu0 0.0
    %1060 = vmatpush1.msra.mxu0 0.0
    %1061 = vmatprep.subr.mxu0 0.0
    %1062 = vmatpush1.msra.mxu0 0.0
    %1063 = vmatprep.subr.mxu0 0.0
    %1064 = vmatpush1.msra.mxu0 0.0
    %1065 = vmatprep.subr.mxu0 0.0
    %1066 = vmatpush1.msra.mxu0 0.0
    %1067 = vmatprep.subr.mxu0 0.0
    %1068 = vmatpush1.msra.mxu0 0.0
    %1069 = vmatprep.subr.mxu0 0.0
    %1070 = vmatpush1.msra.mxu0 0.0
    %1071 = vmatprep.subr.mxu0 0.0
    %1072 = vmatpush1.msra.mxu0 %v209
    %1073 = vmatprep.subr.mxu0 0.0
    %1074 = vmatpush1.msra.mxu0 %v208
    %1075 = vmatprep.subr.mxu0 0.0
    %1076 = vmatpush1.msra.mxu0 %v207
    %1077 = vmatprep.subr.mxu0 0.0
    %1078 = vmatpush1.msra.mxu0 %v206
    %1079 = vmatprep.subr.mxu0 0.0
    %1080 = vmatpush2.msra.mxu0 0.0
    %1081 = vmatprep.subr.mxu0 0.0
    %1082 = vmatpush2.msra.mxu0 0.0
    %1083 = vmatprep.subr.mxu0 0.0
    %1084 = vmatpush2.msra.mxu0 0.0
    %1085 = vmatprep.subr.mxu0 0.0
    %1086 = vmatpush2.msra.mxu0 0.0
    %1087 = vmatprep.subr.mxu0 0.0
    %1088 = vmatpush2.msra.mxu0 0.0
    %1089 = vmatprep.subr.mxu0 0.0
    %1090 = vmatpush2.msra.mxu0 0.0
    %1091 = vmatprep.subr.mxu0 0.0
    %1092 = vmatpush2.msra.mxu0 0.0
    %1093 = vmatprep.subr.mxu0 0.0
    %1094 = vmatpush2.msra.mxu0 0.0
    %1095 = vmatprep.subr.mxu0 0.0
    %1096 = vmatpush2.msra.mxu0 0.0
    %1097 = vmatprep.subr.mxu0 0.0
    %1098 = vmatpush2.msra.mxu0 0.0
    %1099 = vmatprep.subr.mxu0 0.0
    %1100 = vmatpush2.msra.mxu0 0.0
    %1101 = vmatprep.subr.mxu0 0.0
    %1102 = vmatpush2.msra.mxu0 0.0
    %1103 = vmatprep.subr.mxu0 0.0
    %1104 = vmatpush2.msra.mxu0 0.0
    %1105 = vmatprep.subr.mxu0 0.0
    %1106 = vmatpush2.msra.mxu0 0.0
    %1107 = vmatprep.subr.mxu0 0.0
    %1108 = vmatpush2.msra.mxu0 0.0
    %1109 = vmatprep.subr.mxu0 0.0
    %1110 = vmatpush2.msra.mxu0 0.0
    %1111 = vmatprep.mubr.f32.mxu0 0.0
    %1112 = vmatmul.mubr.f32.gmra.mxu0 %v1045
    %v1113 = vpop.f32.mrf.mxu0
    %v1114 = vadd.f32 %v222, %v1113
    %v1115 = vpop.f32.mrf.mxu0
    %1116 = vdwg.mxu0
    %1118 = vrot.lane.b32.xlu0 %v1041, 96
    %v1119 = vpop.permute.xlu0 %1118
    %v1121 = vadd.f32 %v1114, %v1119
    %v1122 = vtanh.pop %v1121
    %v1123 = vrot.slane %v961, 4
    %v1124 = vrot.slane %v961, 5
    %v1127 = vadd.f32 %v190, %v1123
    %v1128 = vadd.f32 %v195, %v1124
    %v1129 = vtanh.pop %v1127
    %v1130 = vtanh.pop %v1128
    %v1133 = vrot.slane %v1129, 4
    %v1134 = vrot.slane %v1130, 3
    %v1135 = vsel %vm231, %v1134, %v1133
    %v1136 = vsel %vm233, %v1135, 0
    %1138 = vmatprep.subr.mxu0 0.0
    %1139 = vmatpush1.msra.mxu0 0.0
    %1140 = vmatprep.subr.mxu0 0.0
    %1141 = vmatpush1.msra.mxu0 0.0
    %1142 = vmatprep.subr.mxu0 0.0
    %1143 = vmatpush1.msra.mxu0 0.0
    %1144 = vmatprep.subr.mxu0 0.0
    %1145 = vmatpush1.msra.mxu0 0.0
    %1146 = vmatprep.subr.mxu0 0.0
    %1147 = vmatpush1.msra.mxu0 0.0
    %1148 = vmatprep.subr.mxu0 0.0
    %1149 = vmatpush1.msra.mxu0 0.0
    %1150 = vmatprep.subr.mxu0 0.0
    %1151 = vmatpush1.msra.mxu0 0.0
    %1152 = vmatprep.subr.mxu0 0.0
    %1153 = vmatpush1.msra.mxu0 0.0
    %1154 = vmatprep.subr.mxu0 0.0
    %1155 = vmatpush1.msra.mxu0 0.0
    %1156 = vmatprep.subr.mxu0 0.0
    %1157 = vmatpush1.msra.mxu0 0.0
    %1158 = vmatprep.subr.mxu0 0.0
    %1159 = vmatpush1.msra.mxu0 0.0
    %1160 = vmatprep.subr.mxu0 0.0
    %1161 = vmatpush1.msra.mxu0 0.0
    %1162 = vmatprep.subr.mxu0 0.0
    %1163 = vmatpush1.msra.mxu0 %v201
    %1164 = vmatprep.subr.mxu0 0.0
    %1165 = vmatpush1.msra.mxu0 %v200
    %1166 = vmatprep.subr.mxu0 0.0
    %1167 = vmatpush1.msra.mxu0 %v199
    %1168 = vmatprep.subr.mxu0 0.0
    %1169 = vmatpush1.msra.mxu0 %v198
    %1170 = vmatprep.subr.mxu0 0.0
    %1171 = vmatpush2.msra.mxu0 0.0
    %1172 = vmatprep.subr.mxu0 0.0
    %1173 = vmatpush2.msra.mxu0 0.0
    %1174 = vmatprep.subr.mxu0 0.0
    %1175 = vmatpush2.msra.mxu0 0.0
    %1176 = vmatprep.subr.mxu0 0.0
    %1177 = vmatpush2.msra.mxu0 0.0
    %1178 = vmatprep.subr.mxu0 0.0
    %1179 = vmatpush2.msra.mxu0 0.0
    %1180 = vmatprep.subr.mxu0 0.0
    %1181 = vmatpush2.msra.mxu0 0.0
    %1182 = vmatprep.subr.mxu0 0.0
    %1183 = vmatpush2.msra.mxu0 0.0
    %1184 = vmatprep.subr.mxu0 0.0
    %1185 = vmatpush2.msra.mxu0 0.0
    %1186 = vmatprep.subr.mxu0 0.0
    %1187 = vmatpush2.msra.mxu0 0.0
    %1188 = vmatprep.subr.mxu0 0.0
    %1189 = vmatpush2.msra.mxu0 0.0
    %1190 = vmatprep.subr.mxu0 0.0
    %1191 = vmatpush2.msra.mxu0 0.0
    %1192 = vmatprep.subr.mxu0 0.0
    %1193 = vmatpush2.msra.mxu0 0.0
    %1194 = vmatprep.subr.mxu0 0.0
    %1195 = vmatpush2.msra.mxu0 0.0
    %1196 = vmatprep.subr.mxu0 0.0
    %1197 = vmatpush2.msra.mxu0 0.0
    %1198 = vmatprep.subr.mxu0 0.0
    %1199 = vmatpush2.msra.mxu0 0.0
    %1200 = vmatprep.subr.mxu0 0.0
    %1201 = vmatpush2.msra.mxu0 0.0
    %1202 = vmatprep.mubr.f32.mxu0 0.0
    %1203 = vmatmul.mubr.f32.gmra.mxu0 %v1136
    %v1204 = vpop.f32.mrf.mxu0
    %v1205 = vadd.f32 0.0, %v1204
    %v1206 = vpop.f32.mrf.mxu0
    %1207 = vdwg.mxu0
    %v1208 = vadd.f32 %v1041, %v215
    %1210 = vrot.lane.b32.xlu0 %v1205, 96
    %v1211 = vpop.permute.xlu0 %1210
    %v1213 = vadd.f32 %v1208, %v1211
    %v1214 = vtanh.pop %v1213
    %v1216 = vsel %vm233, %v1214, 0
    %1218 = vmatprep.subr.mxu0 0.0
    %1219 = vmatpush1.msra.mxu0 0.0
    %1220 = vmatprep.subr.mxu0 0.0
    %1221 = vmatpush1.msra.mxu0 0.0
    %1222 = vmatprep.subr.mxu0 0.0
    %1223 = vmatpush1.msra.mxu0 0.0
    %1224 = vmatprep.subr.mxu0 0.0
    %1225 = vmatpush1.msra.mxu0 0.0
    %1226 = vmatprep.subr.mxu0 0.0
    %1227 = vmatpush1.msra.mxu0 0.0
    %1228 = vmatprep.subr.mxu0 0.0
    %1229 = vmatpush1.msra.mxu0 0.0
    %1230 = vmatprep.subr.mxu0 0.0
    %1231 = vmatpush1.msra.mxu0 0.0
    %1232 = vmatprep.subr.mxu0 0.0
    %1233 = vmatpush1.msra.mxu0 0.0
    %1234 = vmatprep.subr.mxu0 0.0
    %1235 = vmatpush1.msra.mxu0 0.0
    %1236 = vmatprep.subr.mxu0 0.0
    %1237 = vmatpush1.msra.mxu0 0.0
    %1238 = vmatprep.subr.mxu0 0.0
    %1239 = vmatpush1.msra.mxu0 0.0
    %1240 = vmatprep.subr.mxu0 0.0
    %1241 = vmatpush1.msra.mxu0 0.0
    %1242 = vmatprep.subr.mxu0 0.0
    %1243 = vmatpush1.msra.mxu0 %v205
    %1244 = vmatprep.subr.mxu0 0.0
    %1245 = vmatpush1.msra.mxu0 %v204
    %1246 = vmatprep.subr.mxu0 0.0
    %1247 = vmatpush1.msra.mxu0 %v203
    %1248 = vmatprep.subr.mxu0 0.0
    %1249 = vmatpush1.msra.mxu0 %v202
    %1250 = vmatprep.subr.mxu0 0.0
    %1251 = vmatpush2.msra.mxu0 0.0
    %1252 = vmatprep.subr.mxu0 0.0
    %1253 = vmatpush2.msra.mxu0 0.0
    %1254 = vmatprep.subr.mxu0 0.0
    %1255 = vmatpush2.msra.mxu0 0.0
    %1256 = vmatprep.subr.mxu0 0.0
    %1257 = vmatpush2.msra.mxu0 0.0
    %1258 = vmatprep.subr.mxu0 0.0
    %1259 = vmatpush2.msra.mxu0 0.0
    %1260 = vmatprep.subr.mxu0 0.0
    %1261 = vmatpush2.msra.mxu0 0.0
    %1262 = vmatprep.subr.mxu0 0.0
    %1263 = vmatpush2.msra.mxu0 0.0
    %1264 = vmatprep.subr.mxu0 0.0
    %1265 = vmatpush2.msra.mxu0 0.0
    %1266 = vmatprep.subr.mxu0 0.0
    %1267 = vmatpush2.msra.mxu0 0.0
    %1268 = vmatprep.subr.mxu0 0.0
    %1269 = vmatpush2.msra.mxu0 0.0
    %1270 = vmatprep.subr.mxu0 0.0
    %1271 = vmatpush2.msra.mxu0 0.0
    %1272 = vmatprep.subr.mxu0 0.0
    %1273 = vmatpush2.msra.mxu0 0.0
    %1274 = vmatprep.subr.mxu0 0.0
    %1275 = vmatpush2.msra.mxu0 0.0
    %1276 = vmatprep.subr.mxu0 0.0
    %1277 = vmatpush2.msra.mxu0 0.0
    %1278 = vmatprep.subr.mxu0 0.0
    %1279 = vmatpush2.msra.mxu0 0.0
    %1280 = vmatprep.subr.mxu0 0.0
    %1281 = vmatpush2.msra.mxu0 0.0
    %1282 = vmatprep.mubr.f32.mxu0 0.0
    %1283 = vmatmul.mubr.f32.gmra.mxu0 %v1216
    %v1284 = vpop.f32.mrf.mxu0
    %v1285 = vadd.f32 0.0, %v1284
    %v1286 = vpop.f32.mrf.mxu0
    %1287 = vdwg.mxu0
    %v1289 = vsel %vm233, %v1122, 0
    %1291 = vmatprep.subr.mxu0 0.0
    %1292 = vmatpush1.msra.mxu0 0.0
    %1293 = vmatprep.subr.mxu0 0.0
    %1294 = vmatpush1.msra.mxu0 0.0
    %1295 = vmatprep.subr.mxu0 0.0
    %1296 = vmatpush1.msra.mxu0 0.0
    %1297 = vmatprep.subr.mxu0 0.0
    %1298 = vmatpush1.msra.mxu0 0.0
    %1299 = vmatprep.subr.mxu0 0.0
    %1300 = vmatpush1.msra.mxu0 0.0
    %1301 = vmatprep.subr.mxu0 0.0
    %1302 = vmatpush1.msra.mxu0 0.0
    %1303 = vmatprep.subr.mxu0 0.0
    %1304 = vmatpush1.msra.mxu0 0.0
    %1305 = vmatprep.subr.mxu0 0.0
    %1306 = vmatpush1.msra.mxu0 0.0
    %1307 = vmatprep.subr.mxu0 0.0
    %1308 = vmatpush1.msra.mxu0 0.0
    %1309 = vmatprep.subr.mxu0 0.0
    %1310 = vmatpush1.msra.mxu0 0.0
    %1311 = vmatprep.subr.mxu0 0.0
    %1312 = vmatpush1.msra.mxu0 0.0
    %1313 = vmatprep.subr.mxu0 0.0
    %1314 = vmatpush1.msra.mxu0 0.0
    %1315 = vmatprep.subr.mxu0 0.0
    %1316 = vmatpush1.msra.mxu0 %v209
    %1317 = vmatprep.subr.mxu0 0.0
    %1318 = vmatpush1.msra.mxu0 %v208
    %1319 = vmatprep.subr.mxu0 0.0
    %1320 = vmatpush1.msra.mxu0 %v207
    %1321 = vmatprep.subr.mxu0 0.0
    %1322 = vmatpush1.msra.mxu0 %v206
    %1323 = vmatprep.subr.mxu0 0.0
    %1324 = vmatpush2.msra.mxu0 0.0
    %1325 = vmatprep.subr.mxu0 0.0
    %1326 = vmatpush2.msra.mxu0 0.0
    %1327 = vmatprep.subr.mxu0 0.0
    %1328 = vmatpush2.msra.mxu0 0.0
    %1329 = vmatprep.subr.mxu0 0.0
    %1330 = vmatpush2.msra.mxu0 0.0
    %1331 = vmatprep.subr.mxu0 0.0
    %1332 = vmatpush2.msra.mxu0 0.0
    %1333 = vmatprep.subr.mxu0 0.0
    %1334 = vmatpush2.msra.mxu0 0.0
    %1335 = vmatprep.subr.mxu0 0.0
    %1336 = vmatpush2.msra.mxu0 0.0
    %1337 = vmatprep.subr.mxu0 0.0
    %1338 = vmatpush2.msra.mxu0 0.0
    %1339 = vmatprep.subr.mxu0 0.0
    %1340 = vmatpush2.msra.mxu0 0.0
    %1341 = vmatprep.subr.mxu0 0.0
    %1342 = vmatpush2.msra.mxu0 0.0
    %1343 = vmatprep.subr.mxu0 0.0
    %1344 = vmatpush2.msra.mxu0 0.0
    %1345 = vmatprep.subr.mxu0 0.0
    %1346 = vmatpush2.msra.mxu0 0.0
    %1347 = vmatprep.subr.mxu0 0.0
    %1348 = vmatpush2.msra.mxu0 0.0
    %1349 = vmatprep.subr.mxu0 0.0
    %1350 = vmatpush2.msra.mxu0 0.0
    %1351 = vmatprep.subr.mxu0 0.0
    %1352 = vmatpush2.msra.mxu0 0.0
    %1353 = vmatprep.subr.mxu0 0.0
    %1354 = vmatpush2.msra.mxu0 0.0
    %1355 = vmatprep.mubr.f32.mxu0 0.0
    %1356 = vmatmul.mubr.f32.gmra.mxu0 %v1289
    %v1357 = vpop.f32.mrf.mxu0
    %v1358 = vadd.f32 %v222, %v1357
    %v1359 = vpop.f32.mrf.mxu0
    %1360 = vdwg.mxu0
    %1362 = vrot.lane.b32.xlu0 %v1285, 96
    %v1363 = vpop.permute.xlu0 %1362
    %v1365 = vadd.f32 %v1358, %v1363
    %v1366 = vtanh.pop %v1365
    %v1367 = vrot.slane %v1205, 3
    %v1368 = vrot.slane %v1205, 4
    %v1371 = vadd.f32 %v190, %v1367
    %v1372 = vadd.f32 %v195, %v1368
    %v1373 = vtanh.pop %v1371
    %v1374 = vtanh.pop %v1372
    %v1377 = vrot.slane %v1373, 5
    %v1378 = vrot.slane %v1374, 4
    %v1379 = vsel %vm231, %v1378, %v1377
    %v1380 = vsel %vm233, %v1379, 0
    %1382 = vmatprep.subr.mxu0 0.0
    %1383 = vmatpush1.msra.mxu0 0.0
    %1384 = vmatprep.subr.mxu0 0.0
    %1385 = vmatpush1.msra.mxu0 0.0
    %1386 = vmatprep.subr.mxu0 0.0
    %1387 = vmatpush1.msra.mxu0 0.0
    %1388 = vmatprep.subr.mxu0 0.0
    %1389 = vmatpush1.msra.mxu0 0.0
    %1390 = vmatprep.subr.mxu0 0.0
    %1391 = vmatpush1.msra.mxu0 0.0
    %1392 = vmatprep.subr.mxu0 0.0
    %1393 = vmatpush1.msra.mxu0 0.0
    %1394 = vmatprep.subr.mxu0 0.0
    %1395 = vmatpush1.msra.mxu0 0.0
    %1396 = vmatprep.subr.mxu0 0.0
    %1397 = vmatpush1.msra.mxu0 0.0
    %1398 = vmatprep.subr.mxu0 0.0
    %1399 = vmatpush1.msra.mxu0 0.0
    %1400 = vmatprep.subr.mxu0 0.0
    %1401 = vmatpush1.msra.mxu0 0.0
    %1402 = vmatprep.subr.mxu0 0.0
    %1403 = vmatpush1.msra.mxu0 0.0
    %1404 = vmatprep.subr.mxu0 0.0
    %1405 = vmatpush1.msra.mxu0 0.0
    %1406 = vmatprep.subr.mxu0 0.0
    %1407 = vmatpush1.msra.mxu0 %v201
    %1408 = vmatprep.subr.mxu0 0.0
    %1409 = vmatpush1.msra.mxu0 %v200
    %1410 = vmatprep.subr.mxu0 0.0
    %1411 = vmatpush1.msra.mxu0 %v199
    %1412 = vmatprep.subr.mxu0 0.0
    %1413 = vmatpush1.msra.mxu0 %v198
    %1414 = vmatprep.subr.mxu0 0.0
    %1415 = vmatpush2.msra.mxu0 0.0
    %1416 = vmatprep.subr.mxu0 0.0
    %1417 = vmatpush2.msra.mxu0 0.0
    %1418 = vmatprep.subr.mxu0 0.0
    %1419 = vmatpush2.msra.mxu0 0.0
    %1420 = vmatprep.subr.mxu0 0.0
    %1421 = vmatpush2.msra.mxu0 0.0
    %1422 = vmatprep.subr.mxu0 0.0
    %1423 = vmatpush2.msra.mxu0 0.0
    %1424 = vmatprep.subr.mxu0 0.0
    %1425 = vmatpush2.msra.mxu0 0.0
    %1426 = vmatprep.subr.mxu0 0.0
    %1427 = vmatpush2.msra.mxu0 0.0
    %1428 = vmatprep.subr.mxu0 0.0
    %1429 = vmatpush2.msra.mxu0 0.0
    %1430 = vmatprep.subr.mxu0 0.0
    %1431 = vmatpush2.msra.mxu0 0.0
    %1432 = vmatprep.subr.mxu0 0.0
    %1433 = vmatpush2.msra.mxu0 0.0
    %1434 = vmatprep.subr.mxu0 0.0
    %1435 = vmatpush2.msra.mxu0 0.0
    %1436 = vmatprep.subr.mxu0 0.0
    %1437 = vmatpush2.msra.mxu0 0.0
    %1438 = vmatprep.subr.mxu0 0.0
    %1439 = vmatpush2.msra.mxu0 0.0
    %1440 = vmatprep.subr.mxu0 0.0
    %1441 = vmatpush2.msra.mxu0 0.0
    %1442 = vmatprep.subr.mxu0 0.0
    %1443 = vmatpush2.msra.mxu0 0.0
    %1444 = vmatprep.subr.mxu0 0.0
    %1445 = vmatpush2.msra.mxu0 0.0
    %1446 = vmatprep.mubr.f32.mxu0 0.0
    %1447 = vmatmul.mubr.f32.gmra.mxu0 %v1380
    %v1448 = vpop.f32.mrf.mxu0
    %v1449 = vadd.f32 0.0, %v1448
    %v1450 = vpop.f32.mrf.mxu0
    %1451 = vdwg.mxu0
    %v1452 = vadd.f32 %v1285, %v215
    %1454 = vrot.lane.b32.xlu0 %v1449, 96
    %v1455 = vpop.permute.xlu0 %1454
    %v1457 = vadd.f32 %v1452, %v1455
    %v1458 = vtanh.pop %v1457
    %v1460 = vsel %vm233, %v1458, 0
    %1462 = vmatprep.subr.mxu0 0.0
    %1463 = vmatpush1.msra.mxu0 0.0
    %1464 = vmatprep.subr.mxu0 0.0
    %1465 = vmatpush1.msra.mxu0 0.0
    %1466 = vmatprep.subr.mxu0 0.0
    %1467 = vmatpush1.msra.mxu0 0.0
    %1468 = vmatprep.subr.mxu0 0.0
    %1469 = vmatpush1.msra.mxu0 0.0
    %1470 = vmatprep.subr.mxu0 0.0
    %1471 = vmatpush1.msra.mxu0 0.0
    %1472 = vmatprep.subr.mxu0 0.0
    %1473 = vmatpush1.msra.mxu0 0.0
    %1474 = vmatprep.subr.mxu0 0.0
    %1475 = vmatpush1.msra.mxu0 0.0
    %1476 = vmatprep.subr.mxu0 0.0
    %1477 = vmatpush1.msra.mxu0 0.0
    %1478 = vmatprep.subr.mxu0 0.0
    %1479 = vmatpush1.msra.mxu0 0.0
    %1480 = vmatprep.subr.mxu0 0.0
    %1481 = vmatpush1.msra.mxu0 0.0
    %1482 = vmatprep.subr.mxu0 0.0
    %1483 = vmatpush1.msra.mxu0 0.0
    %1484 = vmatprep.subr.mxu0 0.0
    %1485 = vmatpush1.msra.mxu0 0.0
    %1486 = vmatprep.subr.mxu0 0.0
    %1487 = vmatpush1.msra.mxu0 %v205
    %1488 = vmatprep.subr.mxu0 0.0
    %1489 = vmatpush1.msra.mxu0 %v204
    %1490 = vmatprep.subr.mxu0 0.0
    %1491 = vmatpush1.msra.mxu0 %v203
    %1492 = vmatprep.subr.mxu0 0.0
    %1493 = vmatpush1.msra.mxu0 %v202
    %1494 = vmatprep.subr.mxu0 0.0
    %1495 = vmatpush2.msra.mxu0 0.0
    %1496 = vmatprep.subr.mxu0 0.0
    %1497 = vmatpush2.msra.mxu0 0.0
    %1498 = vmatprep.subr.mxu0 0.0
    %1499 = vmatpush2.msra.mxu0 0.0
    %1500 = vmatprep.subr.mxu0 0.0
    %1501 = vmatpush2.msra.mxu0 0.0
    %1502 = vmatprep.subr.mxu0 0.0
    %1503 = vmatpush2.msra.mxu0 0.0
    %1504 = vmatprep.subr.mxu0 0.0
    %1505 = vmatpush2.msra.mxu0 0.0
    %1506 = vmatprep.subr.mxu0 0.0
    %1507 = vmatpush2.msra.mxu0 0.0
    %1508 = vmatprep.subr.mxu0 0.0
    %1509 = vmatpush2.msra.mxu0 0.0
    %1510 = vmatprep.subr.mxu0 0.0
    %1511 = vmatpush2.msra.mxu0 0.0
    %1512 = vmatprep.subr.mxu0 0.0
    %1513 = vmatpush2.msra.mxu0 0.0
    %1514 = vmatprep.subr.mxu0 0.0
    %1515 = vmatpush2.msra.mxu0 0.0
    %1516 = vmatprep.subr.mxu0 0.0
    %1517 = vmatpush2.msra.mxu0 0.0
    %1518 = vmatprep.subr.mxu0 0.0
    %1519 = vmatpush2.msra.mxu0 0.0
    %1520 = vmatprep.subr.mxu0 0.0
    %1521 = vmatpush2.msra.mxu0 0.0
    %1522 = vmatprep.subr.mxu0 0.0
    %1523 = vmatpush2.msra.mxu0 0.0
    %1524 = vmatprep.subr.mxu0 0.0
    %1525 = vmatpush2.msra.mxu0 0.0
    %1526 = vmatprep.mubr.f32.mxu0 0.0
    %1527 = vmatmul.mubr.f32.gmra.mxu0 %v1460
    %v1528 = vpop.f32.mrf.mxu0
    %v1529 = vadd.f32 0.0, %v1528
    %v1530 = vpop.f32.mrf.mxu0
    %1531 = vdwg.mxu0
    %v1533 = vsel %vm233, %v1366, 0
    %1535 = vmatprep.subr.mxu0 0.0
    %1536 = vmatpush1.msra.mxu0 0.0
    %1537 = vmatprep.subr.mxu0 0.0
    %1538 = vmatpush1.msra.mxu0 0.0
    %1539 = vmatprep.subr.mxu0 0.0
    %1540 = vmatpush1.msra.mxu0 0.0
    %1541 = vmatprep.subr.mxu0 0.0
    %1542 = vmatpush1.msra.mxu0 0.0
    %1543 = vmatprep.subr.mxu0 0.0
    %1544 = vmatpush1.msra.mxu0 0.0
    %1545 = vmatprep.subr.mxu0 0.0
    %1546 = vmatpush1.msra.mxu0 0.0
    %1547 = vmatprep.subr.mxu0 0.0
    %1548 = vmatpush1.msra.mxu0 0.0
    %1549 = vmatprep.subr.mxu0 0.0
    %1550 = vmatpush1.msra.mxu0 0.0
    %1551 = vmatprep.subr.mxu0 0.0
    %1552 = vmatpush1.msra.mxu0 0.0
    %1553 = vmatprep.subr.mxu0 0.0
    %1554 = vmatpush1.msra.mxu0 0.0
    %1555 = vmatprep.subr.mxu0 0.0
    %1556 = vmatpush1.msra.mxu0 0.0
    %1557 = vmatprep.subr.mxu0 0.0
    %1558 = vmatpush1.msra.mxu0 0.0
    %1559 = vmatprep.subr.mxu0 0.0
    %1560 = vmatpush1.msra.mxu0 %v209
    %1561 = vmatprep.subr.mxu0 0.0
    %1562 = vmatpush1.msra.mxu0 %v208
    %1563 = vmatprep.subr.mxu0 0.0
    %1564 = vmatpush1.msra.mxu0 %v207
    %1565 = vmatprep.subr.mxu0 0.0
    %1566 = vmatpush1.msra.mxu0 %v206
    %1567 = vmatprep.subr.mxu0 0.0
    %1568 = vmatpush2.msra.mxu0 0.0
    %1569 = vmatprep.subr.mxu0 0.0
    %1570 = vmatpush2.msra.mxu0 0.0
    %1571 = vmatprep.subr.mxu0 0.0
    %1572 = vmatpush2.msra.mxu0 0.0
    %1573 = vmatprep.subr.mxu0 0.0
    %1574 = vmatpush2.msra.mxu0 0.0
    %1575 = vmatprep.subr.mxu0 0.0
    %1576 = vmatpush2.msra.mxu0 0.0
    %1577 = vmatprep.subr.mxu0 0.0
    %1578 = vmatpush2.msra.mxu0 0.0
    %1579 = vmatprep.subr.mxu0 0.0
    %1580 = vmatpush2.msra.mxu0 0.0
    %1581 = vmatprep.subr.mxu0 0.0
    %1582 = vmatpush2.msra.mxu0 0.0
    %1583 = vmatprep.subr.mxu0 0.0
    %1584 = vmatpush2.msra.mxu0 0.0
    %1585 = vmatprep.subr.mxu0 0.0
    %1586 = vmatpush2.msra.mxu0 0.0
    %1587 = vmatprep.subr.mxu0 0.0
    %1588 = vmatpush2.msra.mxu0 0.0
    %1589 = vmatprep.subr.mxu0 0.0
    %1590 = vmatpush2.msra.mxu0 0.0
    %1591 = vmatprep.subr.mxu0 0.0
    %1592 = vmatpush2.msra.mxu0 0.0
    %1593 = vmatprep.subr.mxu0 0.0
    %1594 = vmatpush2.msra.mxu0 0.0
    %1595 = vmatprep.subr.mxu0 0.0
    %1596 = vmatpush2.msra.mxu0 0.0
    %1597 = vmatprep.subr.mxu0 0.0
    %1598 = vmatpush2.msra.mxu0 0.0
    %1599 = vmatprep.mubr.f32.mxu0 0.0
    %1600 = vmatmul.mubr.f32.gmra.mxu0 %v1533
    %v1601 = vpop.f32.mrf.mxu0
    %v1602 = vadd.f32 %v222, %v1601
    %v1603 = vpop.f32.mrf.mxu0
    %1604 = vdwg.mxu0
    %1606 = vrot.lane.b32.xlu0 %v1529, 96
    %v1607 = vpop.permute.xlu0 %1606
    %v1609 = vadd.f32 %v1602, %v1607
    %v1610 = vtanh.pop %v1609
    %v1611 = vrot.slane %v1449, 2
    %v1612 = vrot.slane %v1449, 3
    %v1615 = vadd.f32 %v190, %v1611
    %v1616 = vadd.f32 %v195, %v1612
    %v1617 = vtanh.pop %v1615
    %v1618 = vtanh.pop %v1616
    %v1621 = vrot.slane %v1617, 6
    %v1622 = vrot.slane %v1618, 5
    %v1623 = vsel %vm231, %v1622, %v1621
    %v1624 = vsel %vm233, %v1623, 0
    %1626 = vmatprep.subr.mxu0 0.0
    %1627 = vmatpush1.msra.mxu0 0.0
    %1628 = vmatprep.subr.mxu0 0.0
    %1629 = vmatpush1.msra.mxu0 0.0
    %1630 = vmatprep.subr.mxu0 0.0
    %1631 = vmatpush1.msra.mxu0 0.0
    %1632 = vmatprep.subr.mxu0 0.0
    %1633 = vmatpush1.msra.mxu0 0.0
    %1634 = vmatprep.subr.mxu0 0.0
    %1635 = vmatpush1.msra.mxu0 0.0
    %1636 = vmatprep.subr.mxu0 0.0
    %1637 = vmatpush1.msra.mxu0 0.0
    %1638 = vmatprep.subr.mxu0 0.0
    %1639 = vmatpush1.msra.mxu0 0.0
    %1640 = vmatprep.subr.mxu0 0.0
    %1641 = vmatpush1.msra.mxu0 0.0
    %1642 = vmatprep.subr.mxu0 0.0
    %1643 = vmatpush1.msra.mxu0 0.0
    %1644 = vmatprep.subr.mxu0 0.0
    %1645 = vmatpush1.msra.mxu0 0.0
    %1646 = vmatprep.subr.mxu0 0.0
    %1647 = vmatpush1.msra.mxu0 0.0
    %1648 = vmatprep.subr.mxu0 0.0
    %1649 = vmatpush1.msra.mxu0 0.0
    %1650 = vmatprep.subr.mxu0 0.0
    %1651 = vmatpush1.msra.mxu0 %v201
    %1652 = vmatprep.subr.mxu0 0.0
    %1653 = vmatpush1.msra.mxu0 %v200
    %1654 = vmatprep.subr.mxu0 0.0
    %1655 = vmatpush1.msra.mxu0 %v199
    %1656 = vmatprep.subr.mxu0 0.0
    %1657 = vmatpush1.msra.mxu0 %v198
    %1658 = vmatprep.subr.mxu0 0.0
    %1659 = vmatpush2.msra.mxu0 0.0
    %1660 = vmatprep.subr.mxu0 0.0
    %1661 = vmatpush2.msra.mxu0 0.0
    %1662 = vmatprep.subr.mxu0 0.0
    %1663 = vmatpush2.msra.mxu0 0.0
    %1664 = vmatprep.subr.mxu0 0.0
    %1665 = vmatpush2.msra.mxu0 0.0
    %1666 = vmatprep.subr.mxu0 0.0
    %1667 = vmatpush2.msra.mxu0 0.0
    %1668 = vmatprep.subr.mxu0 0.0
    %1669 = vmatpush2.msra.mxu0 0.0
    %1670 = vmatprep.subr.mxu0 0.0
    %1671 = vmatpush2.msra.mxu0 0.0
    %1672 = vmatprep.subr.mxu0 0.0
    %1673 = vmatpush2.msra.mxu0 0.0
    %1674 = vmatprep.subr.mxu0 0.0
    %1675 = vmatpush2.msra.mxu0 0.0
    %1676 = vmatprep.subr.mxu0 0.0
    %1677 = vmatpush2.msra.mxu0 0.0
    %1678 = vmatprep.subr.mxu0 0.0
    %1679 = vmatpush2.msra.mxu0 0.0
    %1680 = vmatprep.subr.mxu0 0.0
    %1681 = vmatpush2.msra.mxu0 0.0
    %1682 = vmatprep.subr.mxu0 0.0
    %1683 = vmatpush2.msra.mxu0 0.0
    %1684 = vmatprep.subr.mxu0 0.0
    %1685 = vmatpush2.msra.mxu0 0.0
    %1686 = vmatprep.subr.mxu0 0.0
    %1687 = vmatpush2.msra.mxu0 0.0
    %1688 = vmatprep.subr.mxu0 0.0
    %1689 = vmatpush2.msra.mxu0 0.0
    %1690 = vmatprep.mubr.f32.mxu0 0.0
    %1691 = vmatmul.mubr.f32.gmra.mxu0 %v1624
    %v1692 = vpop.f32.mrf.mxu0
    %v1693 = vadd.f32 0.0, %v1692
    %v1694 = vpop.f32.mrf.mxu0
    %1695 = vdwg.mxu0
    %v1696 = vadd.f32 %v1529, %v215
    %1698 = vrot.lane.b32.xlu0 %v1693, 96
    %v1699 = vpop.permute.xlu0 %1698
    %v1701 = vadd.f32 %v1696, %v1699
    %v1702 = vtanh.pop %v1701
    %v1704 = vsel %vm233, %v1702, 0
    %1706 = vmatprep.subr.mxu0 0.0
    %1707 = vmatpush1.msra.mxu0 0.0
    %1708 = vmatprep.subr.mxu0 0.0
    %1709 = vmatpush1.msra.mxu0 0.0
    %1710 = vmatprep.subr.mxu0 0.0
    %1711 = vmatpush1.msra.mxu0 0.0
    %1712 = vmatprep.subr.mxu0 0.0
    %1713 = vmatpush1.msra.mxu0 0.0
    %1714 = vmatprep.subr.mxu0 0.0
    %1715 = vmatpush1.msra.mxu0 0.0
    %1716 = vmatprep.subr.mxu0 0.0
    %1717 = vmatpush1.msra.mxu0 0.0
    %1718 = vmatprep.subr.mxu0 0.0
    %1719 = vmatpush1.msra.mxu0 0.0
    %1720 = vmatprep.subr.mxu0 0.0
    %1721 = vmatpush1.msra.mxu0 0.0
    %1722 = vmatprep.subr.mxu0 0.0
    %1723 = vmatpush1.msra.mxu0 0.0
    %1724 = vmatprep.subr.mxu0 0.0
    %1725 = vmatpush1.msra.mxu0 0.0
    %1726 = vmatprep.subr.mxu0 0.0
    %1727 = vmatpush1.msra.mxu0 0.0
    %1728 = vmatprep.subr.mxu0 0.0
    %1729 = vmatpush1.msra.mxu0 0.0
    %1730 = vmatprep.subr.mxu0 0.0
    %1731 = vmatpush1.msra.mxu0 %v205
    %1732 = vmatprep.subr.mxu0 0.0
    %1733 = vmatpush1.msra.mxu0 %v204
    %1734 = vmatprep.subr.mxu0 0.0
    %1735 = vmatpush1.msra.mxu0 %v203
    %1736 = vmatprep.subr.mxu0 0.0
    %1737 = vmatpush1.msra.mxu0 %v202
    %1738 = vmatprep.subr.mxu0 0.0
    %1739 = vmatpush2.msra.mxu0 0.0
    %1740 = vmatprep.subr.mxu0 0.0
    %1741 = vmatpush2.msra.mxu0 0.0
    %1742 = vmatprep.subr.mxu0 0.0
    %1743 = vmatpush2.msra.mxu0 0.0
    %1744 = vmatprep.subr.mxu0 0.0
    %1745 = vmatpush2.msra.mxu0 0.0
    %1746 = vmatprep.subr.mxu0 0.0
    %1747 = vmatpush2.msra.mxu0 0.0
    %1748 = vmatprep.subr.mxu0 0.0
    %1749 = vmatpush2.msra.mxu0 0.0
    %1750 = vmatprep.subr.mxu0 0.0
    %1751 = vmatpush2.msra.mxu0 0.0
    %1752 = vmatprep.subr.mxu0 0.0
    %1753 = vmatpush2.msra.mxu0 0.0
    %1754 = vmatprep.subr.mxu0 0.0
    %1755 = vmatpush2.msra.mxu0 0.0
    %1756 = vmatprep.subr.mxu0 0.0
    %1757 = vmatpush2.msra.mxu0 0.0
    %1758 = vmatprep.subr.mxu0 0.0
    %1759 = vmatpush2.msra.mxu0 0.0
    %1760 = vmatprep.subr.mxu0 0.0
    %1761 = vmatpush2.msra.mxu0 0.0
    %1762 = vmatprep.subr.mxu0 0.0
    %1763 = vmatpush2.msra.mxu0 0.0
    %1764 = vmatprep.subr.mxu0 0.0
    %1765 = vmatpush2.msra.mxu0 0.0
    %1766 = vmatprep.subr.mxu0 0.0
    %1767 = vmatpush2.msra.mxu0 0.0
    %1768 = vmatprep.subr.mxu0 0.0
    %1769 = vmatpush2.msra.mxu0 0.0
    %1770 = vmatprep.mubr.f32.mxu0 0.0
    %1771 = vmatmul.mubr.f32.gmra.mxu0 %v1704
    %v1772 = vpop.f32.mrf.mxu0
    %v1773 = vadd.f32 0.0, %v1772
    %v1774 = vpop.f32.mrf.mxu0
    %1775 = vdwg.mxu0
    %v1777 = vsel %vm233, %v1610, 0
    %1779 = vmatprep.subr.mxu0 0.0
    %1780 = vmatpush1.msra.mxu0 0.0
    %1781 = vmatprep.subr.mxu0 0.0
    %1782 = vmatpush1.msra.mxu0 0.0
    %1783 = vmatprep.subr.mxu0 0.0
    %1784 = vmatpush1.msra.mxu0 0.0
    %1785 = vmatprep.subr.mxu0 0.0
    %1786 = vmatpush1.msra.mxu0 0.0
    %1787 = vmatprep.subr.mxu0 0.0
    %1788 = vmatpush1.msra.mxu0 0.0
    %1789 = vmatprep.subr.mxu0 0.0
    %1790 = vmatpush1.msra.mxu0 0.0
    %1791 = vmatprep.subr.mxu0 0.0
    %1792 = vmatpush1.msra.mxu0 0.0
    %1793 = vmatprep.subr.mxu0 0.0
    %1794 = vmatpush1.msra.mxu0 0.0
    %1795 = vmatprep.subr.mxu0 0.0
    %1796 = vmatpush1.msra.mxu0 0.0
    %1797 = vmatprep.subr.mxu0 0.0
    %1798 = vmatpush1.msra.mxu0 0.0
    %1799 = vmatprep.subr.mxu0 0.0
    %1800 = vmatpush1.msra.mxu0 0.0
    %1801 = vmatprep.subr.mxu0 0.0
    %1802 = vmatpush1.msra.mxu0 0.0
    %1803 = vmatprep.subr.mxu0 0.0
    %1804 = vmatpush1.msra.mxu0 %v209
    %1805 = vmatprep.subr.mxu0 0.0
    %1806 = vmatpush1.msra.mxu0 %v208
    %1807 = vmatprep.subr.mxu0 0.0
    %1808 = vmatpush1.msra.mxu0 %v207
    %1809 = vmatprep.subr.mxu0 0.0
    %1810 = vmatpush1.msra.mxu0 %v206
    %1811 = vmatprep.subr.mxu0 0.0
    %1812 = vmatpush2.msra.mxu0 0.0
    %1813 = vmatprep.subr.mxu0 0.0
    %1814 = vmatpush2.msra.mxu0 0.0
    %1815 = vmatprep.subr.mxu0 0.0
    %1816 = vmatpush2.msra.mxu0 0.0
    %1817 = vmatprep.subr.mxu0 0.0
    %1818 = vmatpush2.msra.mxu0 0.0
    %1819 = vmatprep.subr.mxu0 0.0
    %1820 = vmatpush2.msra.mxu0 0.0
    %1821 = vmatprep.subr.mxu0 0.0
    %1822 = vmatpush2.msra.mxu0 0.0
    %1823 = vmatprep.subr.mxu0 0.0
    %1824 = vmatpush2.msra.mxu0 0.0
    %1825 = vmatprep.subr.mxu0 0.0
    %1826 = vmatpush2.msra.mxu0 0.0
    %1827 = vmatprep.subr.mxu0 0.0
    %1828 = vmatpush2.msra.mxu0 0.0
    %1829 = vmatprep.subr.mxu0 0.0
    %1830 = vmatpush2.msra.mxu0 0.0
    %1831 = vmatprep.subr.mxu0 0.0
    %1832 = vmatpush2.msra.mxu0 0.0
    %1833 = vmatprep.subr.mxu0 0.0
    %1834 = vmatpush2.msra.mxu0 0.0
    %1835 = vmatprep.subr.mxu0 0.0
    %1836 = vmatpush2.msra.mxu0 0.0
    %1837 = vmatprep.subr.mxu0 0.0
    %1838 = vmatpush2.msra.mxu0 0.0
    %1839 = vmatprep.subr.mxu0 0.0
    %1840 = vmatpush2.msra.mxu0 0.0
    %1841 = vmatprep.subr.mxu0 0.0
    %1842 = vmatpush2.msra.mxu0 0.0
    %1843 = vmatprep.mubr.f32.mxu0 0.0
    %1844 = vmatmul.mubr.f32.gmra.mxu0 %v1777
    %v1845 = vpop.f32.mrf.mxu0
    %v1846 = vadd.f32 %v222, %v1845
    %v1847 = vpop.f32.mrf.mxu0
    %1848 = vdwg.mxu0
    %1850 = vrot.lane.b32.xlu0 %v1773, 96
    %v1851 = vpop.permute.xlu0 %1850
    %v1853 = vadd.f32 %v1846, %v1851
    %v1854 = vtanh.pop %v1853
    %v1855 = vrot.slane %v1693, 1
    %v1856 = vrot.slane %v1693, 2
    %v1859 = vadd.f32 %v190, %v1855
    %v1860 = vadd.f32 %v195, %v1856
    %v1861 = vtanh.pop %v1859
    %v1862 = vtanh.pop %v1860
    %v1865 = vrot.slane %v1861, 7
    %v1866 = vrot.slane %v1862, 6
    %v1867 = vsel %vm231, %v1866, %v1865
    %v1868 = vsel %vm233, %v1867, 0
    %1870 = vmatprep.subr.mxu0 0.0
    %1871 = vmatpush1.msra.mxu0 0.0
    %1872 = vmatprep.subr.mxu0 0.0
    %1873 = vmatpush1.msra.mxu0 0.0
    %1874 = vmatprep.subr.mxu0 0.0
    %1875 = vmatpush1.msra.mxu0 0.0
    %1876 = vmatprep.subr.mxu0 0.0
    %1877 = vmatpush1.msra.mxu0 0.0
    %1878 = vmatprep.subr.mxu0 0.0
    %1879 = vmatpush1.msra.mxu0 0.0
    %1880 = vmatprep.subr.mxu0 0.0
    %1881 = vmatpush1.msra.mxu0 0.0
    %1882 = vmatprep.subr.mxu0 0.0
    %1883 = vmatpush1.msra.mxu0 0.0
    %1884 = vmatprep.subr.mxu0 0.0
    %1885 = vmatpush1.msra.mxu0 0.0
    %1886 = vmatprep.subr.mxu0 0.0
    %1887 = vmatpush1.msra.mxu0 0.0
    %1888 = vmatprep.subr.mxu0 0.0
    %1889 = vmatpush1.msra.mxu0 0.0
    %1890 = vmatprep.subr.mxu0 0.0
    %1891 = vmatpush1.msra.mxu0 0.0
    %1892 = vmatprep.subr.mxu0 0.0
    %1893 = vmatpush1.msra.mxu0 0.0
    %1894 = vmatprep.subr.mxu0 0.0
    %1895 = vmatpush1.msra.mxu0 %v201
    %1896 = vmatprep.subr.mxu0 0.0
    %1897 = vmatpush1.msra.mxu0 %v200
    %1898 = vmatprep.subr.mxu0 0.0
    %1899 = vmatpush1.msra.mxu0 %v199
    %1900 = vmatprep.subr.mxu0 0.0
    %1901 = vmatpush1.msra.mxu0 %v198
    %1902 = vmatprep.subr.mxu0 0.0
    %1903 = vmatpush2.msra.mxu0 0.0
    %1904 = vmatprep.subr.mxu0 0.0
    %1905 = vmatpush2.msra.mxu0 0.0
    %1906 = vmatprep.subr.mxu0 0.0
    %1907 = vmatpush2.msra.mxu0 0.0
    %1908 = vmatprep.subr.mxu0 0.0
    %1909 = vmatpush2.msra.mxu0 0.0
    %1910 = vmatprep.subr.mxu0 0.0
    %1911 = vmatpush2.msra.mxu0 0.0
    %1912 = vmatprep.subr.mxu0 0.0
    %1913 = vmatpush2.msra.mxu0 0.0
    %1914 = vmatprep.subr.mxu0 0.0
    %1915 = vmatpush2.msra.mxu0 0.0
    %1916 = vmatprep.subr.mxu0 0.0
    %1917 = vmatpush2.msra.mxu0 0.0
    %1918 = vmatprep.subr.mxu0 0.0
    %1919 = vmatpush2.msra.mxu0 0.0
    %1920 = vmatprep.subr.mxu0 0.0
    %1921 = vmatpush2.msra.mxu0 0.0
    %1922 = vmatprep.subr.mxu0 0.0
    %1923 = vmatpush2.msra.mxu0 0.0
    %1924 = vmatprep.subr.mxu0 0.0
    %1925 = vmatpush2.msra.mxu0 0.0
    %1926 = vmatprep.subr.mxu0 0.0
    %1927 = vmatpush2.msra.mxu0 0.0
    %1928 = vmatprep.subr.mxu0 0.0
    %1929 = vmatpush2.msra.mxu0 0.0
    %1930 = vmatprep.subr.mxu0 0.0
    %1931 = vmatpush2.msra.mxu0 0.0
    %1932 = vmatprep.subr.mxu0 0.0
    %1933 = vmatpush2.msra.mxu0 0.0
    %1934 = vmatprep.mubr.f32.mxu0 0.0
    %1935 = vmatmul.mubr.f32.gmra.mxu0 %v1868
    %v1936 = vpop.f32.mrf.mxu0
    %v1937 = vadd.f32 0.0, %v1936
    %v1938 = vpop.f32.mrf.mxu0
    %1939 = vdwg.mxu0
    %v1940 = vadd.f32 %v1773, %v215
    %1942 = vrot.lane.b32.xlu0 %v1937, 96
    %v1943 = vpop.permute.xlu0 %1942
    %v1945 = vadd.f32 %v1940, %v1943
    %v1946 = vtanh.pop %v1945
    %v1948 = vsel %vm233, %v1946, 0
    %1950 = vmatprep.subr.mxu0 0.0
    %1951 = vmatpush1.msra.mxu0 0.0
    %1952 = vmatprep.subr.mxu0 0.0
    %1953 = vmatpush1.msra.mxu0 0.0
    %1954 = vmatprep.subr.mxu0 0.0
    %1955 = vmatpush1.msra.mxu0 0.0
    %1956 = vmatprep.subr.mxu0 0.0
    %1957 = vmatpush1.msra.mxu0 0.0
    %1958 = vmatprep.subr.mxu0 0.0
    %1959 = vmatpush1.msra.mxu0 0.0
    %1960 = vmatprep.subr.mxu0 0.0
    %1961 = vmatpush1.msra.mxu0 0.0
    %1962 = vmatprep.subr.mxu0 0.0
    %1963 = vmatpush1.msra.mxu0 0.0
    %1964 = vmatprep.subr.mxu0 0.0
    %1965 = vmatpush1.msra.mxu0 0.0
    %1966 = vmatprep.subr.mxu0 0.0
    %1967 = vmatpush1.msra.mxu0 0.0
    %1968 = vmatprep.subr.mxu0 0.0
    %1969 = vmatpush1.msra.mxu0 0.0
    %1970 = vmatprep.subr.mxu0 0.0
    %1971 = vmatpush1.msra.mxu0 0.0
    %1972 = vmatprep.subr.mxu0 0.0
    %1973 = vmatpush1.msra.mxu0 0.0
    %1974 = vmatprep.subr.mxu0 0.0
    %1975 = vmatpush1.msra.mxu0 %v205
    %1976 = vmatprep.subr.mxu0 0.0
    %1977 = vmatpush1.msra.mxu0 %v204
    %1978 = vmatprep.subr.mxu0 0.0
    %1979 = vmatpush1.msra.mxu0 %v203
    %1980 = vmatprep.subr.mxu0 0.0
    %1981 = vmatpush1.msra.mxu0 %v202
    %1982 = vmatprep.subr.mxu0 0.0
    %1983 = vmatpush2.msra.mxu0 0.0
    %1984 = vmatprep.subr.mxu0 0.0
    %1985 = vmatpush2.msra.mxu0 0.0
    %1986 = vmatprep.subr.mxu0 0.0
    %1987 = vmatpush2.msra.mxu0 0.0
    %1988 = vmatprep.subr.mxu0 0.0
    %1989 = vmatpush2.msra.mxu0 0.0
    %1990 = vmatprep.subr.mxu0 0.0
    %1991 = vmatpush2.msra.mxu0 0.0
    %1992 = vmatprep.subr.mxu0 0.0
    %1993 = vmatpush2.msra.mxu0 0.0
    %1994 = vmatprep.subr.mxu0 0.0
    %1995 = vmatpush2.msra.mxu0 0.0
    %1996 = vmatprep.subr.mxu0 0.0
    %1997 = vmatpush2.msra.mxu0 0.0
    %1998 = vmatprep.subr.mxu0 0.0
    %1999 = vmatpush2.msra.mxu0 0.0
    %2000 = vmatprep.subr.mxu0 0.0
    %2001 = vmatpush2.msra.mxu0 0.0
    %2002 = vmatprep.subr.mxu0 0.0
    %2003 = vmatpush2.msra.mxu0 0.0
    %2004 = vmatprep.subr.mxu0 0.0
    %2005 = vmatpush2.msra.mxu0 0.0
    %2006 = vmatprep.subr.mxu0 0.0
    %2007 = vmatpush2.msra.mxu0 0.0
    %2008 = vmatprep.subr.mxu0 0.0
    %2009 = vmatpush2.msra.mxu0 0.0
    %2010 = vmatprep.subr.mxu0 0.0
    %2011 = vmatpush2.msra.mxu0 0.0
    %2012 = vmatprep.subr.mxu0 0.0
    %2013 = vmatpush2.msra.mxu0 0.0
    %2014 = vmatprep.mubr.f32.mxu0 0.0
    %2015 = vmatmul.mubr.f32.gmra.mxu0 %v1948
    %v2016 = vpop.f32.mrf.mxu0
    %v2017 = vadd.f32 0.0, %v2016
    %v2018 = vpop.f32.mrf.mxu0
    %2019 = vdwg.mxu0
    %v2021 = vsel %vm233, %v1854, 0
    %2023 = vmatprep.subr.mxu0 0.0
    %2024 = vmatpush1.msra.mxu0 0.0
    %2025 = vmatprep.subr.mxu0 0.0
    %2026 = vmatpush1.msra.mxu0 0.0
    %2027 = vmatprep.subr.mxu0 0.0
    %2028 = vmatpush1.msra.mxu0 0.0
    %2029 = vmatprep.subr.mxu0 0.0
    %2030 = vmatpush1.msra.mxu0 0.0
    %2031 = vmatprep.subr.mxu0 0.0
    %2032 = vmatpush1.msra.mxu0 0.0
    %2033 = vmatprep.subr.mxu0 0.0
    %2034 = vmatpush1.msra.mxu0 0.0
    %2035 = vmatprep.subr.mxu0 0.0
    %2036 = vmatpush1.msra.mxu0 0.0
    %2037 = vmatprep.subr.mxu0 0.0
    %2038 = vmatpush1.msra.mxu0 0.0
    %2039 = vmatprep.subr.mxu0 0.0
    %2040 = vmatpush1.msra.mxu0 0.0
    %2041 = vmatprep.subr.mxu0 0.0
    %2042 = vmatpush1.msra.mxu0 0.0
    %2043 = vmatprep.subr.mxu0 0.0
    %2044 = vmatpush1.msra.mxu0 0.0
    %2045 = vmatprep.subr.mxu0 0.0
    %2046 = vmatpush1.msra.mxu0 0.0
    %2047 = vmatprep.subr.mxu0 0.0
    %2048 = vmatpush1.msra.mxu0 %v209
    %2049 = vmatprep.subr.mxu0 0.0
    %2050 = vmatpush1.msra.mxu0 %v208
    %2051 = vmatprep.subr.mxu0 0.0
    %2052 = vmatpush1.msra.mxu0 %v207
    %2053 = vmatprep.subr.mxu0 0.0
    %2054 = vmatpush1.msra.mxu0 %v206
    %2055 = vmatprep.subr.mxu0 0.0
    %2056 = vmatpush2.msra.mxu0 0.0
    %2057 = vmatprep.subr.mxu0 0.0
    %2058 = vmatpush2.msra.mxu0 0.0
    %2059 = vmatprep.subr.mxu0 0.0
    %2060 = vmatpush2.msra.mxu0 0.0
    %2061 = vmatprep.subr.mxu0 0.0
    %2062 = vmatpush2.msra.mxu0 0.0
    %2063 = vmatprep.subr.mxu0 0.0
    %2064 = vmatpush2.msra.mxu0 0.0
    %2065 = vmatprep.subr.mxu0 0.0
    %2066 = vmatpush2.msra.mxu0 0.0
    %2067 = vmatprep.subr.mxu0 0.0
    %2068 = vmatpush2.msra.mxu0 0.0
    %2069 = vmatprep.subr.mxu0 0.0
    %2070 = vmatpush2.msra.mxu0 0.0
    %2071 = vmatprep.subr.mxu0 0.0
    %2072 = vmatpush2.msra.mxu0 0.0
    %2073 = vmatprep.subr.mxu0 0.0
    %2074 = vmatpush2.msra.mxu0 0.0
    %2075 = vmatprep.subr.mxu0 0.0
    %2076 = vmatpush2.msra.mxu0 0.0
    %2077 = vmatprep.subr.mxu0 0.0
    %2078 = vmatpush2.msra.mxu0 0.0
    %2079 = vmatprep.subr.mxu0 0.0
    %2080 = vmatpush2.msra.mxu0 0.0
    %2081 = vmatprep.subr.mxu0 0.0
    %2082 = vmatpush2.msra.mxu0 0.0
    %2083 = vmatprep.subr.mxu0 0.0
    %2084 = vmatpush2.msra.mxu0 0.0
    %2085 = vmatprep.subr.mxu0 0.0
    %2086 = vmatpush2.msra.mxu0 0.0
    %2087 = vmatprep.mubr.f32.mxu0 0.0
    %2088 = vmatmul.mubr.f32.gmra.mxu0 %v2021
    %v2089 = vpop.f32.mrf.mxu0
    %v2090 = vadd.f32 %v222, %v2089
    %v2091 = vpop.f32.mrf.mxu0
    %2092 = vdwg.mxu0
    %2094 = vrot.lane.b32.xlu0 %v2017, 96
    %v2095 = vpop.permute.xlu0 %2094
    %v2097 = vadd.f32 %v2090, %v2095
    %v2098 = vtanh.pop %v2097
    %v2099 = vld [vmem:[%s8] sm:$0x1]
    %v2101 = vlaneseq
    %v2102 = vshrl.u32 %v2101, 7
    %v2103 = vsub.s32 0, %v2102
    %v2104 = vrot.slane %v2099, %v2103
    %v2106 = vmul.f32 %v2098, %v2104
    %vm2107 = vcmask 254976
    %v2108 = vsel %vm2107, %v2106, 0.0
    %2109 = vadd.xlane.f32.xlu0 %v2108
    %v2110 = vpop.xlane.xlu0 %2109
    %v2111 = vld [vmem:[#allocation2] sm:$0x1]
    %v2113 = vlaneseq
    %v2114 = vshrl.u32 %v2113, 7
    %v2115 = vsub.s32 0, %v2114
    %v2116 = vrot.slane %v2111, %v2115
    %v2118 = vadd.f32 %v2110, %v2116
    %vm2119 = vcmask 1024
    %2120 = vst.msk [vmem:[%s10] sm:$0x3] %vm2119, %v2118
    // Predicated region
    $region62: #{tpu_custom_call.1} parent=1 // pred_check
      _
    $region63: #{tpu_custom_call.1} parent=1 // pred_check_branch
      %2122 = sbr.rel (0) target = $region65
    $region64: #{tpu_custom_call.1} parent=1 // pred_region
      _
    $region65: #{tpu_custom_call.1} parent=1 // pred_fallthru
      _
    // Predicated region
    $region66: #{tpu_custom_call.1} parent=1 // pred_check
      _
    $region67: #{tpu_custom_call.1} parent=1 // pred_check_branch
      %2124 = sbr.rel (0) target = $region69
    $region68: #{tpu_custom_call.1} parent=1 // pred_region
      _
    $region69: #{tpu_custom_call.1} parent=1 // pred_fallthru
      _
    %2125 = vsyncpa [#allocation4], 1
    %2126 = vsyncpa [#allocation6], 1
    %2127 = vsyncpa [#allocation9], 1

</llo_original>
